<compile_context>
chip_gen: v7x
topology: tpu7x:2x2x1
jax: 0.10.0
libtpu: 0.0.40
codegen_flags: <defaults>
</compile_context>

<pallas_src>
import functools

import jax
import jax.numpy as jnp
from jax.experimental import pallas as pl
from jax.experimental.pallas import tpu as pltpu


def _st_embed_kernel(x_ref, tf_ref, table_ref, node_ref, o_ref, *,
                     c_in, d_emb, tod_card, chunk_bl, n_chunks):
    """One grid step: a (TBL, N) tile of the (B*L, N) index space.

    x_ref:     (TBL, N, C_in)      float32
    tf_ref:    (TBL, N, 2)         int/float (hour_of_day, day_of_year)
    table_ref: (K_pad, d)          float32   fused [tod | doy | 0-pad] table
    node_ref:  (N, d)              float32   node_table[:N], VMEM-resident
    o_ref:     (TBL, N, C_in + d)  float32
    """
    n = node_ref.shape[0]
    k_pad = table_ref.shape[0]
    chunk_rows = chunk_bl * n

    # x passthrough: one load + one (masked) store covering the whole block.
    o_ref[:, :, 0:c_in] = x_ref[:, :, :].astype(o_ref.dtype)

    node = node_ref[:, :]                      # (N, d)   loaded once per step
    table = table_ref[:, :]                    # (K_pad, d)
    # Column-id plane reused by every chunk (hoisted: broadcast/iota is not CSE'd).
    col = jax.lax.broadcasted_iota(jnp.int32, (chunk_rows, k_pad), 1)

    # Short static unroll over row chunks: bounds the (rows, K) temporaries
    # independently of the (larger) DMA tile.
    for c in range(n_chunks):
        lo = c * chunk_bl
        hi = lo + chunk_bl

        tf = tf_ref[lo:hi, :, :].reshape(chunk_rows, 2).astype(jnp.int32)
        tod_idx = tf[:, 0:1]                   # (rows, 1), values in [0, 12)
        doy_idx = tf[:, 1:2] + tod_card        # (rows, 1), offset into fused table

        # Disjoint ranges -> OR of the two one-hots equals their sum.
        multihot = ((col == tod_idx) | (col == doy_idx)).astype(jnp.float32)

        # One MXU matmul gathers tod_emb + doy_emb for every row of the chunk.
        emb = jnp.dot(multihot, table, preferred_element_type=jnp.float32)
        emb = emb.reshape(chunk_bl, n, d_emb) + node          # + node_emb (broadcast)

        o_ref[lo:hi, :, c_in:c_in + d_emb] = emb.astype(o_ref.dtype)


def _choose_tiles(BL, N, *, step_rows, chunk_rows, max_chunks=16, min_steps=8):
    """Pick (BL-entries per grid step, BL-entries per compute chunk, #chunks)."""
    # Rows per inner compute chunk: a whole number of N-row node groups.
    chunk_bl = 1 if N >= chunk_rows else min(BL, max(1, chunk_rows // N))
    # BL entries per grid step: multiple of chunk_bl targeting ~step_rows rows per
    # step, capped so the unrolled chunk loop stays short and (when the problem is
    # big enough) >= min_steps grid steps remain (pipelining + v7x megacore).
    n_chunks = max(1, min(max_chunks, step_rows // (chunk_bl * N)))
    tbl = min(BL, chunk_bl * n_chunks)
    steps_cap = max(chunk_bl, -(-BL // min_steps))      # ceil(BL / min_steps)
    if tbl > steps_cap:
        tbl = steps_cap
    tbl = max(chunk_bl, (tbl // chunk_bl) * chunk_bl)   # keep chunk_bl | tbl
    return tbl, chunk_bl, tbl // chunk_bl


@functools.partial(jax.jit, static_argnames=("step_rows", "chunk_rows"))
def spatio_temporal_embedding(x, time_features, node_table, tod_table, doy_table,
                              *, step_rows=8192, chunk_rows=1024):
    """JAX wrapper reproducing SpatioTemporalEmbedding.forward."""
    B, L, N, C_in = x.shape
    d_emb = node_table.shape[1]
    n_tod = tod_table.shape[0]
    n_doy = doy_table.shape[0]
    BL = B * L

    # Fused [tod | doy] table; K padded to a multiple of 128 (lane axis of the
    # multi-hot / sublane axis of the matmul RHS).  Pad rows are zero.
    fused = jnp.concatenate([tod_table.astype(jnp.float32),
                             doy_table.astype(jnp.float32)], axis=0)
    k_raw = n_tod + n_doy
    k_pad = ((k_raw + 127) // 128) * 128
    if k_pad != k_raw:
        fused = jnp.pad(fused, ((0, k_pad - k_raw), (0, 0)))

    node_slab = node_table[:N].astype(jnp.float32)        # (N, d)

    # Free (layout-preserving) reshapes; no row padding, no output slice.
    x3 = x.reshape(BL, N, C_in).astype(jnp.float32)
    tf3 = time_features.reshape(BL, N, 2)                 # cast to int32 in-kernel

    tbl, chunk_bl, n_chunks = _choose_tiles(BL, N, step_rows=step_rows,
                                            chunk_rows=chunk_rows)
    grid = (pl.cdiv(BL, tbl),)   # ragged last block handled by Pallas

    kernel = functools.partial(_st_embed_kernel, c_in=C_in, d_emb=d_emb,
                               tod_card=n_tod, chunk_bl=chunk_bl,
                               n_chunks=n_chunks)

    out3 = pl.pallas_call(
        kernel,
        out_shape=jax.ShapeDtypeStruct((BL, N, C_in + d_emb), jnp.float32),
        grid_spec=pltpu.PrefetchScalarGridSpec(
            num_scalar_prefetch=0,
            grid=grid,
            in_specs=[
                pl.BlockSpec((tbl, N, C_in), lambda i: (i, 0, 0)),        # x tile
                pl.BlockSpec((tbl, N, 2), lambda i: (i, 0, 0)),           # time feats
                pl.BlockSpec((k_pad, d_emb), lambda i: (0, 0)),           # fused table
                pl.BlockSpec((N, d_emb), lambda i: (0, 0)),               # node slab
            ],
            out_specs=pl.BlockSpec((tbl, N, C_in + d_emb), lambda i: (i, 0, 0)),
        ),
        compiler_params=pltpu.CompilerParams(
            dimension_semantics=("parallel",),
            vmem_limit_bytes=48 * 1024 * 1024,   # headroom within v7x's 64 MiB
        ),
    )(x3, tf3, fused, node_slab)

    return out3.reshape(B, L, N, C_in + d_emb)


def _reference(x, time_features, node_table, tod_table, doy_table):
    B, L, N, C_in = x.shape
    node_emb = node_table[:N].reshape(1, 1, N, -1)
    tod_emb = tod_table[time_features[..., 0].astype(jnp.int32)]
    doy_emb = doy_table[time_features[..., 1].astype(jnp.int32)]
    combined = node_emb + tod_emb + doy_emb
    return jnp.concatenate([x, combined], axis=-1)


if __name__ == "__main__":
    # Small shapes implied by the forward pass.
    B, L, N, C_in = 2, 8, 16, 4
    d_emb = 32
    num_nodes = 24          # > N exercises node_table[:N] (module default 2911)

    key = jax.random.PRNGKey(0)
    k_x, k_node, k_tod, k_doy, k_h, k_d = jax.random.split(key, 6)

    def emb_init(k, shape):
        # nn.Embedding-style ~N(0,1), rounded to bf16-representable values so the
        # one-hot MXU gather is exact regardless of the f32-matmul precision path.
        t = jax.random.normal(k, shape, dtype=jnp.float32)
        return t.astype(jnp.bfloat16).astype(jnp.float32)

    x = jax.random.normal(k_x, (B, L, N, C_in), dtype=jnp.float32)
    node_table = emb_init(k_node, (num_nodes, d_emb))
    tod_table = emb_init(k_tod, (12, d_emb))
    doy_table = emb_init(k_doy, (366, d_emb))

    hour = jax.random.randint(k_h, (B, L, N, 1), 0, 12)
    doy = jax.random.randint(k_d, (B, L, N, 1), 0, 366)
    time_features = jnp.concatenate([hour, doy], axis=-1).astype(jnp.int32)

    out = spatio_temporal_embedding(x, time_features, node_table,
                                    tod_table, doy_table)
    out = jax.block_until_ready(out)

    ref = _reference(x, time_features, node_table, tod_table, doy_table)
    assert out.shape == (B, L, N, C_in + d_emb), out.shape
    assert jnp.allclose(out, ref, atol=1e-5, rtol=1e-5), "mismatch vs reference"

    print("KERNEL_OK")
</pallas_src>

<mosaic_0001>
module attributes {stable_mosaic.version = 11 : i64} {
  func.func @_st_embed_kernel(%arg0: i32, %arg1: memref<16x16x4xf32, #tpu.memory_space<vmem>>, %arg2: memref<16x16x2xi32, #tpu.memory_space<vmem>>, %arg3: memref<384x32xf32, #tpu.memory_space<vmem>>, %arg4: memref<16x32xf32, #tpu.memory_space<vmem>>, %arg5: memref<16x16x36xf32, #tpu.memory_space<vmem>>) attributes {dimension_semantics = [#tpu.dimension_semantics<parallel>], iteration_bounds = array<i64: 1>, scalar_prefetch = 0 : i64, scratch_operands = 0 : i64, tpu.core_type = #tpu.core_type<tc>, window_params = [{transform_indices = @transform_0, window_bounds = array<i64: 16, 16, 4>}, {transform_indices = @transform_1, window_bounds = array<i64: 16, 16, 2>}, {pipeline_mode = #tpu.pipeline_mode<synchronous>, transform_indices = @transform_2, window_bounds = array<i64: 384, 32>}, {pipeline_mode = #tpu.pipeline_mode<synchronous>, transform_indices = @transform_3, window_bounds = array<i64: 16, 32>}, {transform_indices = @transform_4, window_bounds = array<i64: 16, 16, 36>}]} {
    %c0 = arith.constant 0 : index
    %c0_0 = arith.constant 0 : index
    %c0_1 = arith.constant 0 : index
    %0 = vector.load %arg1[%c0, %c0_0, %c0_1] : memref<16x16x4xf32, #tpu.memory_space<vmem>>, vector<16x16x4xf32>
    %c0_2 = arith.constant 0 : index
    %c0_3 = arith.constant 0 : index
    %c0_4 = arith.constant 0 : index
    %1 = vector.load %arg5[%c0_2, %c0_3, %c0_4] : memref<16x16x36xf32, #tpu.memory_space<vmem>>, vector<16x16x4xf32>
    tpu.vector_store %arg5[%c0_2, %c0_3, %c0_4], %0 {strides = array<i32>} : memref<16x16x36xf32, #tpu.memory_space<vmem>>, vector<16x16x4xf32>,
    %c0_5 = arith.constant 0 : index
    %c0_6 = arith.constant 0 : index
    %2 = vector.load %arg4[%c0_5, %c0_6] : memref<16x32xf32, #tpu.memory_space<vmem>>, vector<16x32xf32>
    %c0_7 = arith.constant 0 : index
    %c0_8 = arith.constant 0 : index
    %3 = vector.load %arg3[%c0_7, %c0_8] : memref<384x32xf32, #tpu.memory_space<vmem>>, vector<384x32xf32>
    %4 = tpu.iota {dimensions = array<i32: 1>} : vector<256x384xi32>
    %c0_9 = arith.constant 0 : index
    %c0_10 = arith.constant 0 : index
    %c0_11 = arith.constant 0 : index
    %5 = vector.load %arg2[%c0_9, %c0_10, %c0_11] : memref<16x16x2xi32, #tpu.memory_space<vmem>>, vector<16x16x2xi32>
    %6 = vector.shape_cast %5 : vector<16x16x2xi32> to vector<256x2xi32>
    %7 = vector.extract_strided_slice %6 {offsets = [0, 0], sizes = [256, 1], strides = [1, 1]} : vector<256x2xi32> to vector<256x1xi32>
    %8 = vector.extract_strided_slice %6 {offsets = [0, 1], sizes = [256, 1], strides = [1, 1]} : vector<256x2xi32> to vector<256x1xi32>
    %c12_i32 = arith.constant 12 : i32
    %9 = vector.broadcast %c12_i32 : i32 to vector<256x1xi32>
    %10 = arith.addi %8, %9 : vector<256x1xi32>
    %11 = vector.broadcast %7 : vector<256x1xi32> to vector<256x384xi32>
    %12 = arith.cmpi eq, %4, %11 : vector<256x384xi32>
    %13 = vector.broadcast %10 : vector<256x1xi32> to vector<256x384xi32>
    %14 = arith.cmpi eq, %4, %13 : vector<256x384xi32>
    %15 = arith.ori %12, %14 : vector<256x384xi1>
    %16 = arith.extui %15 : vector<256x384xi1> to vector<256x384xi32>
    %17 = arith.sitofp %16 : vector<256x384xi32> to vector<256x384xf32>
    %cst = arith.constant dense<0.000000e+00> : vector<256x32xf32>
    %18 = tpu.matmul %17, %3, %cst {dimension_numbers = #tpu.dot_dimension_numbers<[1], [0], [0], [1], [0, 0, 1, 1], [], []>} : vector<256x384xf32>, vector<384x32xf32>, vector<256x32xf32> -> vector<256x32xf32>
    %19 = vector.shape_cast %18 : vector<256x32xf32> to vector<16x16x32xf32>
    %20 = vector.shape_cast %2 : vector<16x32xf32> to vector<1x16x32xf32>
    %21 = vector.broadcast %20 : vector<1x16x32xf32> to vector<16x16x32xf32>
    %22 = arith.addf %19, %21 : vector<16x16x32xf32>
    %c0_12 = arith.constant 0 : index
    %c0_13 = arith.constant 0 : index
    %c4 = arith.constant 4 : index
    %23 = vector.load %arg5[%c0_12, %c0_13, %c4] : memref<16x16x36xf32, #tpu.memory_space<vmem>>, vector<16x16x32xf32>
    tpu.vector_store %arg5[%c0_12, %c0_13, %c4], %22 {strides = array<i32>} : memref<16x16x36xf32, #tpu.memory_space<vmem>>, vector<16x16x32xf32>,
    return
  }
  func.func @transform_0(%arg0: i32) -> (i32, i32, i32) {
    %c0_i32 = arith.constant 0 : i32
    %c0_i32_0 = arith.constant 0 : i32
    %c0_i32_1 = arith.constant 0 : i32
    return %arg0, %c0_i32, %c0_i32_0 : i32, i32, i32
  }
  func.func @transform_1(%arg0: i32) -> (i32, i32, i32) {
    %c0_i32 = arith.constant 0 : i32
    %c0_i32_0 = arith.constant 0 : i32
    %c0_i32_1 = arith.constant 0 : i32
    return %arg0, %c0_i32, %c0_i32_0 : i32, i32, i32
  }
  func.func @transform_2(%arg0: i32) -> (i32, i32) {
    %c0_i32 = arith.constant 0 : i32
    %c0_i32_0 = arith.constant 0 : i32
    %c0_i32_1 = arith.constant 0 : i32
    return %c0_i32, %c0_i32_0 : i32, i32
  }
  func.func @transform_3(%arg0: i32) -> (i32, i32) {
    %c0_i32 = arith.constant 0 : i32
    %c0_i32_0 = arith.constant 0 : i32
    %c0_i32_1 = arith.constant 0 : i32
    return %c0_i32, %c0_i32_0 : i32, i32
  }
  func.func @transform_4(%arg0: i32) -> (i32, i32, i32) {
    %c0_i32 = arith.constant 0 : i32
    %c0_i32_0 = arith.constant 0 : i32
    %c0_i32_1 = arith.constant 0 : i32
    return %arg0, %c0_i32, %c0_i32_0 : i32, i32, i32
  }
}

</mosaic_0001>

<llo_original>
// kernel: spatio_temporal_embedding.1
$region0: #{spatio_temporal_embedding.1}
  #allocation0 [shape = 'u32[]', space=smem, size = 0x4, offset = 0x4, fixed_abs, tag = 'smem constant byte address 0x4 - core index']
  #allocation1 [shape = 'u32[144,128]{1,0:T(1,128)}', space=vmem, size = 0x12000, scoped, tag = 'internal scratch']
  %s0 = inlined_call_operand.vmem [shape: f32[16,16,4], index: 0, kind: input, shape index: {}]
  %s1 = inlined_call_operand.vmem [shape: s32[16,16,2], index: 1, kind: input, shape index: {}]
  %s2 = inlined_call_operand.vmem [shape: f32[384,32], index: 2, kind: input, shape index: {}]
  %s3 = inlined_call_operand.vmem [shape: f32[16,32], index: 3, kind: input, shape index: {}]
  %s4 = inlined_call_operand.hbm [shape: f32[16,16,36], index: 4, kind: output, shape index: {}]
  %s5 = sld [smem:[#allocation0]]
  $region26: #{spatio_temporal_embedding.1} parent=0
    _
  %s7 = ssub.s32 1, %s5
  %s8 = scalar_select 0, %s7, %s5
  $region1: #{spatio_temporal_embedding.1} parent=0
    #allocation2 [shape = 'u8[131072]{0}', space=vmem, size = 0x20000, scoped, tag = 'output window, operand 0, single buffered']
    #allocation3 [shape = 's32[1]{0}', space=sflag, size = 0x4, scoped, tag = 'scoped memory for spatio_temporal_embedding.1']
    %9 = vsyncpa [#allocation3], 0
    // Predicated region
    $region2: #{spatio_temporal_embedding.1} parent=1 // pred_check
      _
    $region3: #{spatio_temporal_embedding.1} parent=1 // pred_check_branch
      %11 = sbr.rel (0) target = $region5
    $region4: #{spatio_temporal_embedding.1} parent=1 // pred_region
      _
    $region5: #{spatio_temporal_embedding.1} parent=1 // pred_fallthru
      _
    // Predicated region
    $region6: #{spatio_temporal_embedding.1} parent=1 // pred_check
      _
    $region7: #{spatio_temporal_embedding.1} parent=1 // pred_check_branch
      %13 = sbr.rel (0) target = $region9
    $region8: #{spatio_temporal_embedding.1} parent=1 // pred_region
      _
    $region9: #{spatio_temporal_embedding.1} parent=1 // pred_fallthru
      _
    // Predicated region
    $region10: #{spatio_temporal_embedding.1} parent=1 // pred_check
      _
    $region11: #{spatio_temporal_embedding.1} parent=1 // pred_check_branch
      %15 = sbr.rel (0) target = $region13
    $region12: #{spatio_temporal_embedding.1} parent=1 // pred_region
      _
    $region13: #{spatio_temporal_embedding.1} parent=1 // pred_fallthru
      _
    // Predicated region
    $region14: #{spatio_temporal_embedding.1} parent=1 // pred_check
      _
    $region15: #{spatio_temporal_embedding.1} parent=1 // pred_check_branch
      %17 = sbr.rel (0) target = $region17
    $region16: #{spatio_temporal_embedding.1} parent=1 // pred_region
      _
    $region17: #{spatio_temporal_embedding.1} parent=1 // pred_fallthru
      _
    %v18 = vld [vmem:[%s0] sm:$0xff]
    %v19 = vld [vmem:[%s0 + $0x8] sm:$0xff]
    %v20 = vld [vmem:[%s0 + $0x10] sm:$0xff]
    %v21 = vld [vmem:[%s0 + $0x18] sm:$0xff]
    %v22 = vld [vmem:[%s0 + $0x20] sm:$0xff]
    %v23 = vld [vmem:[%s0 + $0x28] sm:$0xff]
    %v24 = vld [vmem:[%s0 + $0x30] sm:$0xff]
    %v25 = vld [vmem:[%s0 + $0x38] sm:$0xff]
    %v26 = vld [vmem:[%s0 + $0x40] sm:$0xff]
    %v27 = vld [vmem:[%s0 + $0x48] sm:$0xff]
    %v28 = vld [vmem:[%s0 + $0x50] sm:$0xff]
    %v29 = vld [vmem:[%s0 + $0x58] sm:$0xff]
    %v30 = vld [vmem:[%s0 + $0x60] sm:$0xff]
    %v31 = vld [vmem:[%s0 + $0x68] sm:$0xff]
    %v32 = vld [vmem:[%s0 + $0x70] sm:$0xff]
    %v33 = vld [vmem:[%s0 + $0x78] sm:$0xff]
    %v34 = vld [vmem:[%s0 + $0x80] sm:$0xff]
    %v35 = vld [vmem:[%s0 + $0x88] sm:$0xff]
    %v36 = vld [vmem:[%s0 + $0x90] sm:$0xff]
    %v37 = vld [vmem:[%s0 + $0x98] sm:$0xff]
    %v38 = vld [vmem:[%s0 + $0xa0] sm:$0xff]
    %v39 = vld [vmem:[%s0 + $0xa8] sm:$0xff]
    %v40 = vld [vmem:[%s0 + $0xb0] sm:$0xff]
    %v41 = vld [vmem:[%s0 + $0xb8] sm:$0xff]
    %v42 = vld [vmem:[%s0 + $0xc0] sm:$0xff]
    %v43 = vld [vmem:[%s0 + $0xc8] sm:$0xff]
    %v44 = vld [vmem:[%s0 + $0xd0] sm:$0xff]
    %v45 = vld [vmem:[%s0 + $0xd8] sm:$0xff]
    %v46 = vld [vmem:[%s0 + $0xe0] sm:$0xff]
    %v47 = vld [vmem:[%s0 + $0xe8] sm:$0xff]
    %v48 = vld [vmem:[%s0 + $0xf0] sm:$0xff]
    %v49 = vld [vmem:[%s0 + $0xf8] sm:$0xff]
    %vm50 = vcmask 31744
    %51 = vst.msk [vmem:[#allocation2] sm:$0xff] %vm50, %v18
    %52 = vst.msk [vmem:[#allocation2 + $0x8] sm:$0xff] %vm50, %v19
    %53 = vst.msk [vmem:[#allocation2 + $0x10] sm:$0xff] %vm50, %v20
    %54 = vst.msk [vmem:[#allocation2 + $0x18] sm:$0xff] %vm50, %v21
    %55 = vst.msk [vmem:[#allocation2 + $0x20] sm:$0xff] %vm50, %v22
    %56 = vst.msk [vmem:[#allocation2 + $0x28] sm:$0xff] %vm50, %v23
    %57 = vst.msk [vmem:[#allocation2 + $0x30] sm:$0xff] %vm50, %v24
    %58 = vst.msk [vmem:[#allocation2 + $0x38] sm:$0xff] %vm50, %v25
    %59 = vst.msk [vmem:[#allocation2 + $0x40] sm:$0xff] %vm50, %v26
    %60 = vst.msk [vmem:[#allocation2 + $0x48] sm:$0xff] %vm50, %v27
    %61 = vst.msk [vmem:[#allocation2 + $0x50] sm:$0xff] %vm50, %v28
    %62 = vst.msk [vmem:[#allocation2 + $0x58] sm:$0xff] %vm50, %v29
    %63 = vst.msk [vmem:[#allocation2 + $0x60] sm:$0xff] %vm50, %v30
    %64 = vst.msk [vmem:[#allocation2 + $0x68] sm:$0xff] %vm50, %v31
    %65 = vst.msk [vmem:[#allocation2 + $0x70] sm:$0xff] %vm50, %v32
    %66 = vst.msk [vmem:[#allocation2 + $0x78] sm:$0xff] %vm50, %v33
    %67 = vst.msk [vmem:[#allocation2 + $0x80] sm:$0xff] %vm50, %v34
    %68 = vst.msk [vmem:[#allocation2 + $0x88] sm:$0xff] %vm50, %v35
    %69 = vst.msk [vmem:[#allocation2 + $0x90] sm:$0xff] %vm50, %v36
    %70 = vst.msk [vmem:[#allocation2 + $0x98] sm:$0xff] %vm50, %v37
    %71 = vst.msk [vmem:[#allocation2 + $0xa0] sm:$0xff] %vm50, %v38
    %72 = vst.msk [vmem:[#allocation2 + $0xa8] sm:$0xff] %vm50, %v39
    %73 = vst.msk [vmem:[#allocation2 + $0xb0] sm:$0xff] %vm50, %v40
    %74 = vst.msk [vmem:[#allocation2 + $0xb8] sm:$0xff] %vm50, %v41
    %75 = vst.msk [vmem:[#allocation2 + $0xc0] sm:$0xff] %vm50, %v42
    %76 = vst.msk [vmem:[#allocation2 + $0xc8] sm:$0xff] %vm50, %v43
    %77 = vst.msk [vmem:[#allocation2 + $0xd0] sm:$0xff] %vm50, %v44
    %78 = vst.msk [vmem:[#allocation2 + $0xd8] sm:$0xff] %vm50, %v45
    %79 = vst.msk [vmem:[#allocation2 + $0xe0] sm:$0xff] %vm50, %v46
    %80 = vst.msk [vmem:[#allocation2 + $0xe8] sm:$0xff] %vm50, %v47
    %81 = vst.msk [vmem:[#allocation2 + $0xf0] sm:$0xff] %vm50, %v48
    %82 = vst.msk [vmem:[#allocation2 + $0xf8] sm:$0xff] %vm50, %v49
    %v83 = vld [vmem:[%s3] sm:$0xff]
    %v84 = vld [vmem:[%s3 + $0x8] sm:$0xff]
    %v85 = vld [vmem:[%s2] sm:$0xff]
    %v86 = vld [vmem:[%s2 + $0x8] sm:$0xff]
    %v87 = vld [vmem:[%s2 + $0x10] sm:$0xff]
    %v88 = vld [vmem:[%s2 + $0x18] sm:$0xff]
    %v89 = vld [vmem:[%s2 + $0x20] sm:$0xff]
    %v90 = vld [vmem:[%s2 + $0x28] sm:$0xff]
    %v91 = vld [vmem:[%s2 + $0x30] sm:$0xff]
    %v92 = vld [vmem:[%s2 + $0x38] sm:$0xff]
    %v93 = vld [vmem:[%s2 + $0x40] sm:$0xff]
    %v94 = vld [vmem:[%s2 + $0x48] sm:$0xff]
    %v95 = vld [vmem:[%s2 + $0x50] sm:$0xff]
    %v96 = vld [vmem:[%s2 + $0x58] sm:$0xff]
    %v97 = vld [vmem:[%s2 + $0x60] sm:$0xff]
    %v98 = vld [vmem:[%s2 + $0x68] sm:$0xff]
    %v99 = vld [vmem:[%s2 + $0x70] sm:$0xff]
    %v100 = vld [vmem:[%s2 + $0x78] sm:$0xff]
    %v101 = vld [vmem:[%s2 + $0x80] sm:$0xff]
    %v102 = vld [vmem:[%s2 + $0x88] sm:$0xff]
    %v103 = vld [vmem:[%s2 + $0x90] sm:$0xff]
    %v104 = vld [vmem:[%s2 + $0x98] sm:$0xff]
    %v105 = vld [vmem:[%s2 + $0xa0] sm:$0xff]
    %v106 = vld [vmem:[%s2 + $0xa8] sm:$0xff]
    %v107 = vld [vmem:[%s2 + $0xb0] sm:$0xff]
    %v108 = vld [vmem:[%s2 + $0xb8] sm:$0xff]
    %v109 = vld [vmem:[%s2 + $0xc0] sm:$0xff]
    %v110 = vld [vmem:[%s2 + $0xc8] sm:$0xff]
    %v111 = vld [vmem:[%s2 + $0xd0] sm:$0xff]
    %v112 = vld [vmem:[%s2 + $0xd8] sm:$0xff]
    %v113 = vld [vmem:[%s2 + $0xe0] sm:$0xff]
    %v114 = vld [vmem:[%s2 + $0xe8] sm:$0xff]
    %v115 = vld [vmem:[%s2 + $0xf0] sm:$0xff]
    %v116 = vld [vmem:[%s2 + $0xf8] sm:$0xff]
    %v117 = vld [vmem:[%s2 + $0x100] sm:$0xff]
    %v118 = vld [vmem:[%s2 + $0x108] sm:$0xff]
    %v119 = vld [vmem:[%s2 + $0x110] sm:$0xff]
    %v120 = vld [vmem:[%s2 + $0x118] sm:$0xff]
    %v121 = vld [vmem:[%s2 + $0x120] sm:$0xff]
    %v122 = vld [vmem:[%s2 + $0x128] sm:$0xff]
    %v123 = vld [vmem:[%s2 + $0x130] sm:$0xff]
    %v124 = vld [vmem:[%s2 + $0x138] sm:$0xff]
    %v125 = vld [vmem:[%s2 + $0x140] sm:$0xff]
    %v126 = vld [vmem:[%s2 + $0x148] sm:$0xff]
    %v127 = vld [vmem:[%s2 + $0x150] sm:$0xff]
    %v128 = vld [vmem:[%s2 + $0x158] sm:$0xff]
    %v129 = vld [vmem:[%s2 + $0x160] sm:$0xff]
    %v130 = vld [vmem:[%s2 + $0x168] sm:$0xff]
    %v131 = vld [vmem:[%s2 + $0x170] sm:$0xff]
    %v132 = vld [vmem:[%s2 + $0x178] sm:$0xff]
    %v133 = vlaneseq
    %v134 = vand.u32 %v133, 127
    %v135 = vadd.s32 %v134, 128
    %v136 = vadd.s32 %v134, 256
    %v137 = vld [vmem:[%s1] sm:$0xff]
    %v138 = vld [vmem:[%s1 + $0x8] sm:$0xff]
    %v139 = vld [vmem:[%s1 + $0x10] sm:$0xff]
    %v140 = vld [vmem:[%s1 + $0x18] sm:$0xff]
    %v141 = vld [vmem:[%s1 + $0x20] sm:$0xff]
    %v142 = vld [vmem:[%s1 + $0x28] sm:$0xff]
    %v143 = vld [vmem:[%s1 + $0x30] sm:$0xff]
    %v144 = vld [vmem:[%s1 + $0x38] sm:$0xff]
    %v145 = vld [vmem:[%s1 + $0x40] sm:$0xff]
    %v146 = vld [vmem:[%s1 + $0x48] sm:$0xff]
    %v147 = vld [vmem:[%s1 + $0x50] sm:$0xff]
    %v148 = vld [vmem:[%s1 + $0x58] sm:$0xff]
    %v149 = vld [vmem:[%s1 + $0x60] sm:$0xff]
    %v150 = vld [vmem:[%s1 + $0x68] sm:$0xff]
    %v151 = vld [vmem:[%s1 + $0x70] sm:$0xff]
    %v152 = vld [vmem:[%s1 + $0x78] sm:$0xff]
    %v153 = vld [vmem:[%s1 + $0x80] sm:$0xff]
    %v154 = vld [vmem:[%s1 + $0x88] sm:$0xff]
    %v155 = vld [vmem:[%s1 + $0x90] sm:$0xff]
    %v156 = vld [vmem:[%s1 + $0x98] sm:$0xff]
    %v157 = vld [vmem:[%s1 + $0xa0] sm:$0xff]
    %v158 = vld [vmem:[%s1 + $0xa8] sm:$0xff]
    %v159 = vld [vmem:[%s1 + $0xb0] sm:$0xff]
    %v160 = vld [vmem:[%s1 + $0xb8] sm:$0xff]
    %v161 = vld [vmem:[%s1 + $0xc0] sm:$0xff]
    %v162 = vld [vmem:[%s1 + $0xc8] sm:$0xff]
    %v163 = vld [vmem:[%s1 + $0xd0] sm:$0xff]
    %v164 = vld [vmem:[%s1 + $0xd8] sm:$0xff]
    %v165 = vld [vmem:[%s1 + $0xe0] sm:$0xff]
    %v166 = vld [vmem:[%s1 + $0xe8] sm:$0xff]
    %v167 = vld [vmem:[%s1 + $0xf0] sm:$0xff]
    %v168 = vld [vmem:[%s1 + $0xf8] sm:$0xff]
    %v169 = vadd.s32 %v137, 12
    %v170 = vadd.s32 %v138, 12
    %v171 = vadd.s32 %v139, 12
    %v172 = vadd.s32 %v140, 12
    %v173 = vadd.s32 %v141, 12
    %v174 = vadd.s32 %v142, 12
    %v175 = vadd.s32 %v143, 12
    %v176 = vadd.s32 %v144, 12
    %v177 = vadd.s32 %v145, 12
    %v178 = vadd.s32 %v146, 12
    %v179 = vadd.s32 %v147, 12
    %v180 = vadd.s32 %v148, 12
    %v181 = vadd.s32 %v149, 12
    %v182 = vadd.s32 %v150, 12
    %v183 = vadd.s32 %v151, 12
    %v184 = vadd.s32 %v152, 12
    %v185 = vadd.s32 %v153, 12
    %v186 = vadd.s32 %v154, 12
    %v187 = vadd.s32 %v155, 12
    %v188 = vadd.s32 %v156, 12
    %v189 = vadd.s32 %v157, 12
    %v190 = vadd.s32 %v158, 12
    %v191 = vadd.s32 %v159, 12
    %v192 = vadd.s32 %v160, 12
    %v193 = vadd.s32 %v161, 12
    %v194 = vadd.s32 %v162, 12
    %v195 = vadd.s32 %v163, 12
    %v196 = vadd.s32 %v164, 12
    %v197 = vadd.s32 %v165, 12
    %v198 = vadd.s32 %v166, 12
    %v199 = vadd.s32 %v167, 12
    %v200 = vadd.s32 %v168, 12
    %201 = vset.pattern.permute.xlu0 0
    %202 = vperm.xlu0 %201, %v137
    %v203 = vpop.permute.xlu0 %202
    %204 = vset.pattern.permute.xlu0 0
    %205 = vperm.xlu0 %204, %v138
    %v206 = vpop.permute.xlu0 %205
    %207 = vset.pattern.permute.xlu0 0
    %208 = vperm.xlu0 %207, %v139
    %v209 = vpop.permute.xlu0 %208
    %210 = vset.pattern.permute.xlu0 0
    %211 = vperm.xlu0 %210, %v140
    %v212 = vpop.permute.xlu0 %211
    %213 = vset.pattern.permute.xlu0 0
    %214 = vperm.xlu0 %213, %v141
    %v215 = vpop.permute.xlu0 %214
    %216 = vset.pattern.permute.xlu0 0
    %217 = vperm.xlu0 %216, %v142
    %v218 = vpop.permute.xlu0 %217
    %219 = vset.pattern.permute.xlu0 0
    %220 = vperm.xlu0 %219, %v143
    %v221 = vpop.permute.xlu0 %220
    %222 = vset.pattern.permute.xlu0 0
    %223 = vperm.xlu0 %222, %v144
    %v224 = vpop.permute.xlu0 %223
    %225 = vset.pattern.permute.xlu0 0
    %226 = vperm.xlu0 %225, %v145
    %v227 = vpop.permute.xlu0 %226
    %228 = vset.pattern.permute.xlu0 0
    %229 = vperm.xlu0 %228, %v146
    %v230 = vpop.permute.xlu0 %229
    %231 = vset.pattern.permute.xlu0 0
    %232 = vperm.xlu0 %231, %v147
    %v233 = vpop.permute.xlu0 %232
    %234 = vset.pattern.permute.xlu0 0
    %235 = vperm.xlu0 %234, %v148
    %v236 = vpop.permute.xlu0 %235
    %237 = vset.pattern.permute.xlu0 0
    %238 = vperm.xlu0 %237, %v149
    %v239 = vpop.permute.xlu0 %238
    %240 = vset.pattern.permute.xlu0 0
    %241 = vperm.xlu0 %240, %v150
    %v242 = vpop.permute.xlu0 %241
    %243 = vset.pattern.permute.xlu0 0
    %244 = vperm.xlu0 %243, %v151
    %v245 = vpop.permute.xlu0 %244
    %246 = vset.pattern.permute.xlu0 0
    %247 = vperm.xlu0 %246, %v152
    %v248 = vpop.permute.xlu0 %247
    %249 = vset.pattern.permute.xlu0 0
    %250 = vperm.xlu0 %249, %v153
    %v251 = vpop.permute.xlu0 %250
    %252 = vset.pattern.permute.xlu0 0
    %253 = vperm.xlu0 %252, %v154
    %v254 = vpop.permute.xlu0 %253
    %255 = vset.pattern.permute.xlu0 0
    %256 = vperm.xlu0 %255, %v155
    %v257 = vpop.permute.xlu0 %256
    %258 = vset.pattern.permute.xlu0 0
    %259 = vperm.xlu0 %258, %v156
    %v260 = vpop.permute.xlu0 %259
    %261 = vset.pattern.permute.xlu0 0
    %262 = vperm.xlu0 %261, %v157
    %v263 = vpop.permute.xlu0 %262
    %264 = vset.pattern.permute.xlu0 0
    %265 = vperm.xlu0 %264, %v158
    %v266 = vpop.permute.xlu0 %265
    %267 = vset.pattern.permute.xlu0 0
    %268 = vperm.xlu0 %267, %v159
    %v269 = vpop.permute.xlu0 %268
    %270 = vset.pattern.permute.xlu0 0
    %271 = vperm.xlu0 %270, %v160
    %v272 = vpop.permute.xlu0 %271
    %273 = vset.pattern.permute.xlu0 0
    %274 = vperm.xlu0 %273, %v161
    %v275 = vpop.permute.xlu0 %274
    %276 = vset.pattern.permute.xlu0 0
    %277 = vperm.xlu0 %276, %v162
    %v278 = vpop.permute.xlu0 %277
    %279 = vset.pattern.permute.xlu0 0
    %280 = vperm.xlu0 %279, %v163
    %v281 = vpop.permute.xlu0 %280
    %282 = vset.pattern.permute.xlu0 0
    %283 = vperm.xlu0 %282, %v164
    %v284 = vpop.permute.xlu0 %283
    %285 = vset.pattern.permute.xlu0 0
    %286 = vperm.xlu0 %285, %v165
    %v287 = vpop.permute.xlu0 %286
    %288 = vset.pattern.permute.xlu0 0
    %289 = vperm.xlu0 %288, %v166
    %v290 = vpop.permute.xlu0 %289
    %291 = vset.pattern.permute.xlu0 0
    %292 = vperm.xlu0 %291, %v167
    %v293 = vpop.permute.xlu0 %292
    %294 = vset.pattern.permute.xlu0 0
    %295 = vperm.xlu0 %294, %v168
    %v296 = vpop.permute.xlu0 %295
    %vm297 = vcmp.eq.s32.totalorder %v134, %v203
    %vm298 = vcmp.eq.s32.totalorder %v135, %v203
    %vm299 = vcmp.eq.s32.totalorder %v136, %v203
    %vm300 = vcmp.eq.s32.totalorder %v134, %v206
    %vm301 = vcmp.eq.s32.totalorder %v135, %v206
    %vm302 = vcmp.eq.s32.totalorder %v136, %v206
    %vm303 = vcmp.eq.s32.totalorder %v134, %v209
    %vm304 = vcmp.eq.s32.totalorder %v135, %v209
    %vm305 = vcmp.eq.s32.totalorder %v136, %v209
    %vm306 = vcmp.eq.s32.totalorder %v134, %v212
    %vm307 = vcmp.eq.s32.totalorder %v135, %v212
    %vm308 = vcmp.eq.s32.totalorder %v136, %v212
    %vm309 = vcmp.eq.s32.totalorder %v134, %v215
    %vm310 = vcmp.eq.s32.totalorder %v135, %v215
    %vm311 = vcmp.eq.s32.totalorder %v136, %v215
    %vm312 = vcmp.eq.s32.totalorder %v134, %v218
    %vm313 = vcmp.eq.s32.totalorder %v135, %v218
    %vm314 = vcmp.eq.s32.totalorder %v136, %v218
    %vm315 = vcmp.eq.s32.totalorder %v134, %v221
    %vm316 = vcmp.eq.s32.totalorder %v135, %v221
    %vm317 = vcmp.eq.s32.totalorder %v136, %v221
    %vm318 = vcmp.eq.s32.totalorder %v134, %v224
    %vm319 = vcmp.eq.s32.totalorder %v135, %v224
    %vm320 = vcmp.eq.s32.totalorder %v136, %v224
    %vm321 = vcmp.eq.s32.totalorder %v134, %v227
    %vm322 = vcmp.eq.s32.totalorder %v135, %v227
    %vm323 = vcmp.eq.s32.totalorder %v136, %v227
    %vm324 = vcmp.eq.s32.totalorder %v134, %v230
    %vm325 = vcmp.eq.s32.totalorder %v135, %v230
    %vm326 = vcmp.eq.s32.totalorder %v136, %v230
    %vm327 = vcmp.eq.s32.totalorder %v134, %v233
    %vm328 = vcmp.eq.s32.totalorder %v135, %v233
    %vm329 = vcmp.eq.s32.totalorder %v136, %v233
    %vm330 = vcmp.eq.s32.totalorder %v134, %v236
    %vm331 = vcmp.eq.s32.totalorder %v135, %v236
    %vm332 = vcmp.eq.s32.totalorder %v136, %v236
    %vm333 = vcmp.eq.s32.totalorder %v134, %v239
    %vm334 = vcmp.eq.s32.totalorder %v135, %v239
    %vm335 = vcmp.eq.s32.totalorder %v136, %v239
    %vm336 = vcmp.eq.s32.totalorder %v134, %v242
    %vm337 = vcmp.eq.s32.totalorder %v135, %v242
    %vm338 = vcmp.eq.s32.totalorder %v136, %v242
    %vm339 = vcmp.eq.s32.totalorder %v134, %v245
    %vm340 = vcmp.eq.s32.totalorder %v135, %v245
    %vm341 = vcmp.eq.s32.totalorder %v136, %v245
    %vm342 = vcmp.eq.s32.totalorder %v134, %v248
    %vm343 = vcmp.eq.s32.totalorder %v135, %v248
    %vm344 = vcmp.eq.s32.totalorder %v136, %v248
    %vm345 = vcmp.eq.s32.totalorder %v134, %v251
    %vm346 = vcmp.eq.s32.totalorder %v135, %v251
    %vm347 = vcmp.eq.s32.totalorder %v136, %v251
    %vm348 = vcmp.eq.s32.totalorder %v134, %v254
    %vm349 = vcmp.eq.s32.totalorder %v135, %v254
    %vm350 = vcmp.eq.s32.totalorder %v136, %v254
    %vm351 = vcmp.eq.s32.totalorder %v134, %v257
    %vm352 = vcmp.eq.s32.totalorder %v135, %v257
    %vm353 = vcmp.eq.s32.totalorder %v136, %v257
    %vm354 = vcmp.eq.s32.totalorder %v134, %v260
    %vm355 = vcmp.eq.s32.totalorder %v135, %v260
    %vm356 = vcmp.eq.s32.totalorder %v136, %v260
    %vm357 = vcmp.eq.s32.totalorder %v134, %v263
    %vm358 = vcmp.eq.s32.totalorder %v135, %v263
    %vm359 = vcmp.eq.s32.totalorder %v136, %v263
    %vm360 = vcmp.eq.s32.totalorder %v134, %v266
    %vm361 = vcmp.eq.s32.totalorder %v135, %v266
    %vm362 = vcmp.eq.s32.totalorder %v136, %v266
    %vm363 = vcmp.eq.s32.totalorder %v134, %v269
    %vm364 = vcmp.eq.s32.totalorder %v135, %v269
    %vm365 = vcmp.eq.s32.totalorder %v136, %v269
    %vm366 = vcmp.eq.s32.totalorder %v134, %v272
    %vm367 = vcmp.eq.s32.totalorder %v135, %v272
    %vm368 = vcmp.eq.s32.totalorder %v136, %v272
    %vm369 = vcmp.eq.s32.totalorder %v134, %v275
    %vm370 = vcmp.eq.s32.totalorder %v135, %v275
    %vm371 = vcmp.eq.s32.totalorder %v136, %v275
    %vm372 = vcmp.eq.s32.totalorder %v134, %v278
    %vm373 = vcmp.eq.s32.totalorder %v135, %v278
    %vm374 = vcmp.eq.s32.totalorder %v136, %v278
    %vm375 = vcmp.eq.s32.totalorder %v134, %v281
    %vm376 = vcmp.eq.s32.totalorder %v135, %v281
    %vm377 = vcmp.eq.s32.totalorder %v136, %v281
    %vm378 = vcmp.eq.s32.totalorder %v134, %v284
    %vm379 = vcmp.eq.s32.totalorder %v135, %v284
    %vm380 = vcmp.eq.s32.totalorder %v136, %v284
    %vm381 = vcmp.eq.s32.totalorder %v134, %v287
    %vm382 = vcmp.eq.s32.totalorder %v135, %v287
    %vm383 = vcmp.eq.s32.totalorder %v136, %v287
    %vm384 = vcmp.eq.s32.totalorder %v134, %v290
    %vm385 = vcmp.eq.s32.totalorder %v135, %v290
    %vm386 = vcmp.eq.s32.totalorder %v136, %v290
    %vm387 = vcmp.eq.s32.totalorder %v134, %v293
    %vm388 = vcmp.eq.s32.totalorder %v135, %v293
    %vm389 = vcmp.eq.s32.totalorder %v136, %v293
    %vm390 = vcmp.eq.s32.totalorder %v134, %v296
    %vm391 = vcmp.eq.s32.totalorder %v135, %v296
    %vm392 = vcmp.eq.s32.totalorder %v136, %v296
    %393 = vset.pattern.permute.xlu0 1
    %394 = vperm.xlu0 %393, %v169
    %v395 = vpop.permute.xlu0 %394
    %396 = vset.pattern.permute.xlu0 1
    %397 = vperm.xlu0 %396, %v170
    %v398 = vpop.permute.xlu0 %397
    %399 = vset.pattern.permute.xlu0 1
    %400 = vperm.xlu0 %399, %v171
    %v401 = vpop.permute.xlu0 %400
    %402 = vset.pattern.permute.xlu0 1
    %403 = vperm.xlu0 %402, %v172
    %v404 = vpop.permute.xlu0 %403
    %405 = vset.pattern.permute.xlu0 1
    %406 = vperm.xlu0 %405, %v173
    %v407 = vpop.permute.xlu0 %406
    %408 = vset.pattern.permute.xlu0 1
    %409 = vperm.xlu0 %408, %v174
    %v410 = vpop.permute.xlu0 %409
    %411 = vset.pattern.permute.xlu0 1
    %412 = vperm.xlu0 %411, %v175
    %v413 = vpop.permute.xlu0 %412
    %414 = vset.pattern.permute.xlu0 1
    %415 = vperm.xlu0 %414, %v176
    %v416 = vpop.permute.xlu0 %415
    %417 = vset.pattern.permute.xlu0 1
    %418 = vperm.xlu0 %417, %v177
    %v419 = vpop.permute.xlu0 %418
    %420 = vset.pattern.permute.xlu0 1
    %421 = vperm.xlu0 %420, %v178
    %v422 = vpop.permute.xlu0 %421
    %423 = vset.pattern.permute.xlu0 1
    %424 = vperm.xlu0 %423, %v179
    %v425 = vpop.permute.xlu0 %424
    %426 = vset.pattern.permute.xlu0 1
    %427 = vperm.xlu0 %426, %v180
    %v428 = vpop.permute.xlu0 %427
    %429 = vset.pattern.permute.xlu0 1
    %430 = vperm.xlu0 %429, %v181
    %v431 = vpop.permute.xlu0 %430
    %432 = vset.pattern.permute.xlu0 1
    %433 = vperm.xlu0 %432, %v182
    %v434 = vpop.permute.xlu0 %433
    %435 = vset.pattern.permute.xlu0 1
    %436 = vperm.xlu0 %435, %v183
    %v437 = vpop.permute.xlu0 %436
    %438 = vset.pattern.permute.xlu0 1
    %439 = vperm.xlu0 %438, %v184
    %v440 = vpop.permute.xlu0 %439
    %441 = vset.pattern.permute.xlu0 1
    %442 = vperm.xlu0 %441, %v185
    %v443 = vpop.permute.xlu0 %442
    %444 = vset.pattern.permute.xlu0 1
    %445 = vperm.xlu0 %444, %v186
    %v446 = vpop.permute.xlu0 %445
    %447 = vset.pattern.permute.xlu0 1
    %448 = vperm.xlu0 %447, %v187
    %v449 = vpop.permute.xlu0 %448
    %450 = vset.pattern.permute.xlu0 1
    %451 = vperm.xlu0 %450, %v188
    %v452 = vpop.permute.xlu0 %451
    %453 = vset.pattern.permute.xlu0 1
    %454 = vperm.xlu0 %453, %v189
    %v455 = vpop.permute.xlu0 %454
    %456 = vset.pattern.permute.xlu0 1
    %457 = vperm.xlu0 %456, %v190
    %v458 = vpop.permute.xlu0 %457
    %459 = vset.pattern.permute.xlu0 1
    %460 = vperm.xlu0 %459, %v191
    %v461 = vpop.permute.xlu0 %460
    %462 = vset.pattern.permute.xlu0 1
    %463 = vperm.xlu0 %462, %v192
    %v464 = vpop.permute.xlu0 %463
    %465 = vset.pattern.permute.xlu0 1
    %466 = vperm.xlu0 %465, %v193
    %v467 = vpop.permute.xlu0 %466
    %468 = vset.pattern.permute.xlu0 1
    %469 = vperm.xlu0 %468, %v194
    %v470 = vpop.permute.xlu0 %469
    %471 = vset.pattern.permute.xlu0 1
    %472 = vperm.xlu0 %471, %v195
    %v473 = vpop.permute.xlu0 %472
    %474 = vset.pattern.permute.xlu0 1
    %475 = vperm.xlu0 %474, %v196
    %v476 = vpop.permute.xlu0 %475
    %477 = vset.pattern.permute.xlu0 1
    %478 = vperm.xlu0 %477, %v197
    %v479 = vpop.permute.xlu0 %478
    %480 = vset.pattern.permute.xlu0 1
    %481 = vperm.xlu0 %480, %v198
    %v482 = vpop.permute.xlu0 %481
    %483 = vset.pattern.permute.xlu0 1
    %484 = vperm.xlu0 %483, %v199
    %v485 = vpop.permute.xlu0 %484
    %486 = vset.pattern.permute.xlu0 1
    %487 = vperm.xlu0 %486, %v200
    %v488 = vpop.permute.xlu0 %487
    %vm489 = vcmp.eq.s32.totalorder %v134, %v395
    %vm490 = vcmp.eq.s32.totalorder %v135, %v395
    %vm491 = vcmp.eq.s32.totalorder %v136, %v395
    %vm492 = vcmp.eq.s32.totalorder %v134, %v398
    %vm493 = vcmp.eq.s32.totalorder %v135, %v398
    %vm494 = vcmp.eq.s32.totalorder %v136, %v398
    %vm495 = vcmp.eq.s32.totalorder %v134, %v401
    %vm496 = vcmp.eq.s32.totalorder %v135, %v401
    %vm497 = vcmp.eq.s32.totalorder %v136, %v401
    %vm498 = vcmp.eq.s32.totalorder %v134, %v404
    %vm499 = vcmp.eq.s32.totalorder %v135, %v404
    %vm500 = vcmp.eq.s32.totalorder %v136, %v404
    %vm501 = vcmp.eq.s32.totalorder %v134, %v407
    %vm502 = vcmp.eq.s32.totalorder %v135, %v407
    %vm503 = vcmp.eq.s32.totalorder %v136, %v407
    %vm504 = vcmp.eq.s32.totalorder %v134, %v410
    %vm505 = vcmp.eq.s32.totalorder %v135, %v410
    %vm506 = vcmp.eq.s32.totalorder %v136, %v410
    %vm507 = vcmp.eq.s32.totalorder %v134, %v413
    %vm508 = vcmp.eq.s32.totalorder %v135, %v413
    %vm509 = vcmp.eq.s32.totalorder %v136, %v413
    %vm510 = vcmp.eq.s32.totalorder %v134, %v416
    %vm511 = vcmp.eq.s32.totalorder %v135, %v416
    %vm512 = vcmp.eq.s32.totalorder %v136, %v416
    %vm513 = vcmp.eq.s32.totalorder %v134, %v419
    %vm514 = vcmp.eq.s32.totalorder %v135, %v419
    %vm515 = vcmp.eq.s32.totalorder %v136, %v419
    %vm516 = vcmp.eq.s32.totalorder %v134, %v422
    %vm517 = vcmp.eq.s32.totalorder %v135, %v422
    %vm518 = vcmp.eq.s32.totalorder %v136, %v422
    %vm519 = vcmp.eq.s32.totalorder %v134, %v425
    %vm520 = vcmp.eq.s32.totalorder %v135, %v425
    %vm521 = vcmp.eq.s32.totalorder %v136, %v425
    %vm522 = vcmp.eq.s32.totalorder %v134, %v428
    %vm523 = vcmp.eq.s32.totalorder %v135, %v428
    %vm524 = vcmp.eq.s32.totalorder %v136, %v428
    %vm525 = vcmp.eq.s32.totalorder %v134, %v431
    %vm526 = vcmp.eq.s32.totalorder %v135, %v431
    %vm527 = vcmp.eq.s32.totalorder %v136, %v431
    %vm528 = vcmp.eq.s32.totalorder %v134, %v434
    %vm529 = vcmp.eq.s32.totalorder %v135, %v434
    %vm530 = vcmp.eq.s32.totalorder %v136, %v434
    %vm531 = vcmp.eq.s32.totalorder %v134, %v437
    %vm532 = vcmp.eq.s32.totalorder %v135, %v437
    %vm533 = vcmp.eq.s32.totalorder %v136, %v437
    %vm534 = vcmp.eq.s32.totalorder %v134, %v440
    %vm535 = vcmp.eq.s32.totalorder %v135, %v440
    %vm536 = vcmp.eq.s32.totalorder %v136, %v440
    %vm537 = vcmp.eq.s32.totalorder %v134, %v443
    %vm538 = vcmp.eq.s32.totalorder %v135, %v443
    %vm539 = vcmp.eq.s32.totalorder %v136, %v443
    %vm540 = vcmp.eq.s32.totalorder %v134, %v446
    %vm541 = vcmp.eq.s32.totalorder %v135, %v446
    %vm542 = vcmp.eq.s32.totalorder %v136, %v446
    %vm543 = vcmp.eq.s32.totalorder %v134, %v449
    %vm544 = vcmp.eq.s32.totalorder %v135, %v449
    %vm545 = vcmp.eq.s32.totalorder %v136, %v449
    %vm546 = vcmp.eq.s32.totalorder %v134, %v452
    %vm547 = vcmp.eq.s32.totalorder %v135, %v452
    %vm548 = vcmp.eq.s32.totalorder %v136, %v452
    %vm549 = vcmp.eq.s32.totalorder %v134, %v455
    %vm550 = vcmp.eq.s32.totalorder %v135, %v455
    %vm551 = vcmp.eq.s32.totalorder %v136, %v455
    %vm552 = vcmp.eq.s32.totalorder %v134, %v458
    %vm553 = vcmp.eq.s32.totalorder %v135, %v458
    %vm554 = vcmp.eq.s32.totalorder %v136, %v458
    %vm555 = vcmp.eq.s32.totalorder %v134, %v461
    %vm556 = vcmp.eq.s32.totalorder %v135, %v461
    %vm557 = vcmp.eq.s32.totalorder %v136, %v461
    %vm558 = vcmp.eq.s32.totalorder %v134, %v464
    %vm559 = vcmp.eq.s32.totalorder %v135, %v464
    %vm560 = vcmp.eq.s32.totalorder %v136, %v464
    %vm561 = vcmp.eq.s32.totalorder %v134, %v467
    %vm562 = vcmp.eq.s32.totalorder %v135, %v467
    %vm563 = vcmp.eq.s32.totalorder %v136, %v467
    %vm564 = vcmp.eq.s32.totalorder %v134, %v470
    %vm565 = vcmp.eq.s32.totalorder %v135, %v470
    %vm566 = vcmp.eq.s32.totalorder %v136, %v470
    %vm567 = vcmp.eq.s32.totalorder %v134, %v473
    %vm568 = vcmp.eq.s32.totalorder %v135, %v473
    %vm569 = vcmp.eq.s32.totalorder %v136, %v473
    %vm570 = vcmp.eq.s32.totalorder %v134, %v476
    %vm571 = vcmp.eq.s32.totalorder %v135, %v476
    %vm572 = vcmp.eq.s32.totalorder %v136, %v476
    %vm573 = vcmp.eq.s32.totalorder %v134, %v479
    %vm574 = vcmp.eq.s32.totalorder %v135, %v479
    %vm575 = vcmp.eq.s32.totalorder %v136, %v479
    %vm576 = vcmp.eq.s32.totalorder %v134, %v482
    %vm577 = vcmp.eq.s32.totalorder %v135, %v482
    %vm578 = vcmp.eq.s32.totalorder %v136, %v482
    %vm579 = vcmp.eq.s32.totalorder %v134, %v485
    %vm580 = vcmp.eq.s32.totalorder %v135, %v485
    %vm581 = vcmp.eq.s32.totalorder %v136, %v485
    %vm582 = vcmp.eq.s32.totalorder %v134, %v488
    %vm583 = vcmp.eq.s32.totalorder %v135, %v488
    %vm584 = vcmp.eq.s32.totalorder %v136, %v488
    %vm585 = vmor %vm297, %vm489
    %vm586 = vmor %vm298, %vm490
    %vm587 = vmor %vm299, %vm491
    %vm588 = vmor %vm300, %vm492
    %vm589 = vmor %vm301, %vm493
    %vm590 = vmor %vm302, %vm494
    %vm591 = vmor %vm303, %vm495
    %vm592 = vmor %vm304, %vm496
    %vm593 = vmor %vm305, %vm497
    %vm594 = vmor %vm306, %vm498
    %vm595 = vmor %vm307, %vm499
    %vm596 = vmor %vm308, %vm500
    %vm597 = vmor %vm309, %vm501
    %vm598 = vmor %vm310, %vm502
    %vm599 = vmor %vm311, %vm503
    %vm600 = vmor %vm312, %vm504
    %vm601 = vmor %vm313, %vm505
    %vm602 = vmor %vm314, %vm506
    %vm603 = vmor %vm315, %vm507
    %vm604 = vmor %vm316, %vm508
    %vm605 = vmor %vm317, %vm509
    %vm606 = vmor %vm318, %vm510
    %vm607 = vmor %vm319, %vm511
    %vm608 = vmor %vm320, %vm512
    %vm609 = vmor %vm321, %vm513
    %vm610 = vmor %vm322, %vm514
    %vm611 = vmor %vm323, %vm515
    %vm612 = vmor %vm324, %vm516
    %vm613 = vmor %vm325, %vm517
    %vm614 = vmor %vm326, %vm518
    %vm615 = vmor %vm327, %vm519
    %vm616 = vmor %vm328, %vm520
    %vm617 = vmor %vm329, %vm521
    %vm618 = vmor %vm330, %vm522
    %vm619 = vmor %vm331, %vm523
    %vm620 = vmor %vm332, %vm524
    %vm621 = vmor %vm333, %vm525
    %vm622 = vmor %vm334, %vm526
    %vm623 = vmor %vm335, %vm527
    %vm624 = vmor %vm336, %vm528
    %vm625 = vmor %vm337, %vm529
    %vm626 = vmor %vm338, %vm530
    %vm627 = vmor %vm339, %vm531
    %vm628 = vmor %vm340, %vm532
    %vm629 = vmor %vm341, %vm533
    %vm630 = vmor %vm342, %vm534
    %vm631 = vmor %vm343, %vm535
    %vm632 = vmor %vm344, %vm536
    %vm633 = vmor %vm345, %vm537
    %vm634 = vmor %vm346, %vm538
    %vm635 = vmor %vm347, %vm539
    %vm636 = vmor %vm348, %vm540
    %vm637 = vmor %vm349, %vm541
    %vm638 = vmor %vm350, %vm542
    %vm639 = vmor %vm351, %vm543
    %vm640 = vmor %vm352, %vm544
    %vm641 = vmor %vm353, %vm545
    %vm642 = vmor %vm354, %vm546
    %vm643 = vmor %vm355, %vm547
    %vm644 = vmor %vm356, %vm548
    %vm645 = vmor %vm357, %vm549
    %vm646 = vmor %vm358, %vm550
    %vm647 = vmor %vm359, %vm551
    %vm648 = vmor %vm360, %vm552
    %vm649 = vmor %vm361, %vm553
    %vm650 = vmor %vm362, %vm554
    %vm651 = vmor %vm363, %vm555
    %vm652 = vmor %vm364, %vm556
    %vm653 = vmor %vm365, %vm557
    %vm654 = vmor %vm366, %vm558
    %vm655 = vmor %vm367, %vm559
    %vm656 = vmor %vm368, %vm560
    %vm657 = vmor %vm369, %vm561
    %vm658 = vmor %vm370, %vm562
    %vm659 = vmor %vm371, %vm563
    %vm660 = vmor %vm372, %vm564
    %vm661 = vmor %vm373, %vm565
    %vm662 = vmor %vm374, %vm566
    %vm663 = vmor %vm375, %vm567
    %vm664 = vmor %vm376, %vm568
    %vm665 = vmor %vm377, %vm569
    %vm666 = vmor %vm378, %vm570
    %vm667 = vmor %vm379, %vm571
    %vm668 = vmor %vm380, %vm572
    %vm669 = vmor %vm381, %vm573
    %vm670 = vmor %vm382, %vm574
    %vm671 = vmor %vm383, %vm575
    %vm672 = vmor %vm384, %vm576
    %vm673 = vmor %vm385, %vm577
    %vm674 = vmor %vm386, %vm578
    %vm675 = vmor %vm387, %vm579
    %vm676 = vmor %vm388, %vm580
    %vm677 = vmor %vm389, %vm581
    %vm678 = vmor %vm390, %vm582
    %vm679 = vmor %vm391, %vm583
    %vm680 = vmor %vm392, %vm584
    %v681 = vsel %vm585, 1, 0
    %v682 = vsel %vm586, 1, 0
    %v683 = vsel %vm587, 1, 0
    %v684 = vsel %vm588, 1, 0
    %v685 = vsel %vm589, 1, 0
    %v686 = vsel %vm590, 1, 0
    %v687 = vsel %vm591, 1, 0
    %v688 = vsel %vm592, 1, 0
    %v689 = vsel %vm593, 1, 0
    %v690 = vsel %vm594, 1, 0
    %v691 = vsel %vm595, 1, 0
    %v692 = vsel %vm596, 1, 0
    %v693 = vsel %vm597, 1, 0
    %v694 = vsel %vm598, 1, 0
    %v695 = vsel %vm599, 1, 0
    %v696 = vsel %vm600, 1, 0
    %v697 = vsel %vm601, 1, 0
    %v698 = vsel %vm602, 1, 0
    %v699 = vsel %vm603, 1, 0
    %v700 = vsel %vm604, 1, 0
    %v701 = vsel %vm605, 1, 0
    %v702 = vsel %vm606, 1, 0
    %v703 = vsel %vm607, 1, 0
    %v704 = vsel %vm608, 1, 0
    %v705 = vsel %vm609, 1, 0
    %v706 = vsel %vm610, 1, 0
    %v707 = vsel %vm611, 1, 0
    %v708 = vsel %vm612, 1, 0
    %v709 = vsel %vm613, 1, 0
    %v710 = vsel %vm614, 1, 0
    %v711 = vsel %vm615, 1, 0
    %v712 = vsel %vm616, 1, 0
    %v713 = vsel %vm617, 1, 0
    %v714 = vsel %vm618, 1, 0
    %v715 = vsel %vm619, 1, 0
    %v716 = vsel %vm620, 1, 0
    %v717 = vsel %vm621, 1, 0
    %v718 = vsel %vm622, 1, 0
    %v719 = vsel %vm623, 1, 0
    %v720 = vsel %vm624, 1, 0
    %v721 = vsel %vm625, 1, 0
    %v722 = vsel %vm626, 1, 0
    %v723 = vsel %vm627, 1, 0
    %v724 = vsel %vm628, 1, 0
    %v725 = vsel %vm629, 1, 0
    %v726 = vsel %vm630, 1, 0
    %v727 = vsel %vm631, 1, 0
    %v728 = vsel %vm632, 1, 0
    %v729 = vsel %vm633, 1, 0
    %v730 = vsel %vm634, 1, 0
    %v731 = vsel %vm635, 1, 0
    %v732 = vsel %vm636, 1, 0
    %v733 = vsel %vm637, 1, 0
    %v734 = vsel %vm638, 1, 0
    %v735 = vsel %vm639, 1, 0
    %v736 = vsel %vm640, 1, 0
    %v737 = vsel %vm641, 1, 0
    %v738 = vsel %vm642, 1, 0
    %v739 = vsel %vm643, 1, 0
    %v740 = vsel %vm644, 1, 0
    %v741 = vsel %vm645, 1, 0
    %v742 = vsel %vm646, 1, 0
    %v743 = vsel %vm647, 1, 0
    %v744 = vsel %vm648, 1, 0
    %v745 = vsel %vm649, 1, 0
    %v746 = vsel %vm650, 1, 0
    %v747 = vsel %vm651, 1, 0
    %v748 = vsel %vm652, 1, 0
    %v749 = vsel %vm653, 1, 0
    %v750 = vsel %vm654, 1, 0
    %v751 = vsel %vm655, 1, 0
    %v752 = vsel %vm656, 1, 0
    %v753 = vsel %vm657, 1, 0
    %v754 = vsel %vm658, 1, 0
    %v755 = vsel %vm659, 1, 0
    %v756 = vsel %vm660, 1, 0
    %v757 = vsel %vm661, 1, 0
    %v758 = vsel %vm662, 1, 0
    %v759 = vsel %vm663, 1, 0
    %v760 = vsel %vm664, 1, 0
    %v761 = vsel %vm665, 1, 0
    %v762 = vsel %vm666, 1, 0
    %v763 = vsel %vm667, 1, 0
    %v764 = vsel %vm668, 1, 0
    %v765 = vsel %vm669, 1, 0
    %v766 = vsel %vm670, 1, 0
    %v767 = vsel %vm671, 1, 0
    %v768 = vsel %vm672, 1, 0
    %v769 = vsel %vm673, 1, 0
    %v770 = vsel %vm674, 1, 0
    %v771 = vsel %vm675, 1, 0
    %v772 = vsel %vm676, 1, 0
    %v773 = vsel %vm677, 1, 0
    %v774 = vsel %vm678, 1, 0
    %v775 = vsel %vm679, 1, 0
    %v776 = vsel %vm680, 1, 0
    %v777 = vcvt.s32.f32 %v681
    %v778 = vcvt.s32.f32 %v682
    %v779 = vcvt.s32.f32 %v683
    %v780 = vcvt.s32.f32 %v684
    %v781 = vcvt.s32.f32 %v685
    %v782 = vcvt.s32.f32 %v686
    %v783 = vcvt.s32.f32 %v687
    %v784 = vcvt.s32.f32 %v688
    %v785 = vcvt.s32.f32 %v689
    %v786 = vcvt.s32.f32 %v690
    %v787 = vcvt.s32.f32 %v691
    %v788 = vcvt.s32.f32 %v692
    %v789 = vcvt.s32.f32 %v693
    %v790 = vcvt.s32.f32 %v694
    %v791 = vcvt.s32.f32 %v695
    %v792 = vcvt.s32.f32 %v696
    %v793 = vcvt.s32.f32 %v697
    %v794 = vcvt.s32.f32 %v698
    %v795 = vcvt.s32.f32 %v699
    %v796 = vcvt.s32.f32 %v700
    %v797 = vcvt.s32.f32 %v701
    %v798 = vcvt.s32.f32 %v702
    %v799 = vcvt.s32.f32 %v703
    %v800 = vcvt.s32.f32 %v704
    %v801 = vcvt.s32.f32 %v705
    %v802 = vcvt.s32.f32 %v706
    %v803 = vcvt.s32.f32 %v707
    %v804 = vcvt.s32.f32 %v708
    %v805 = vcvt.s32.f32 %v709
    %v806 = vcvt.s32.f32 %v710
    %v807 = vcvt.s32.f32 %v711
    %v808 = vcvt.s32.f32 %v712
    %v809 = vcvt.s32.f32 %v713
    %v810 = vcvt.s32.f32 %v714
    %v811 = vcvt.s32.f32 %v715
    %v812 = vcvt.s32.f32 %v716
    %v813 = vcvt.s32.f32 %v717
    %v814 = vcvt.s32.f32 %v718
    %v815 = vcvt.s32.f32 %v719
    %v816 = vcvt.s32.f32 %v720
    %v817 = vcvt.s32.f32 %v721
    %v818 = vcvt.s32.f32 %v722
    %v819 = vcvt.s32.f32 %v723
    %v820 = vcvt.s32.f32 %v724
    %v821 = vcvt.s32.f32 %v725
    %v822 = vcvt.s32.f32 %v726
    %v823 = vcvt.s32.f32 %v727
    %v824 = vcvt.s32.f32 %v728
    %v825 = vcvt.s32.f32 %v729
    %v826 = vcvt.s32.f32 %v730
    %v827 = vcvt.s32.f32 %v731
    %v828 = vcvt.s32.f32 %v732
    %v829 = vcvt.s32.f32 %v733
    %v830 = vcvt.s32.f32 %v734
    %v831 = vcvt.s32.f32 %v735
    %v832 = vcvt.s32.f32 %v736
    %v833 = vcvt.s32.f32 %v737
    %v834 = vcvt.s32.f32 %v738
    %v835 = vcvt.s32.f32 %v739
    %v836 = vcvt.s32.f32 %v740
    %v837 = vcvt.s32.f32 %v741
    %v838 = vcvt.s32.f32 %v742
    %v839 = vcvt.s32.f32 %v743
    %v840 = vcvt.s32.f32 %v744
    %v841 = vcvt.s32.f32 %v745
    %v842 = vcvt.s32.f32 %v746
    %v843 = vcvt.s32.f32 %v747
    %v844 = vcvt.s32.f32 %v748
    %v845 = vcvt.s32.f32 %v749
    %v846 = vcvt.s32.f32 %v750
    %v847 = vcvt.s32.f32 %v751
    %v848 = vcvt.s32.f32 %v752
    %v849 = vcvt.s32.f32 %v753
    %v850 = vcvt.s32.f32 %v754
    %v851 = vcvt.s32.f32 %v755
    %v852 = vcvt.s32.f32 %v756
    %v853 = vcvt.s32.f32 %v757
    %v854 = vcvt.s32.f32 %v758
    %v855 = vcvt.s32.f32 %v759
    %v856 = vcvt.s32.f32 %v760
    %v857 = vcvt.s32.f32 %v761
    %v858 = vcvt.s32.f32 %v762
    %v859 = vcvt.s32.f32 %v763
    %v860 = vcvt.s32.f32 %v764
    %v861 = vcvt.s32.f32 %v765
    %v862 = vcvt.s32.f32 %v766
    %v863 = vcvt.s32.f32 %v767
    %v864 = vcvt.s32.f32 %v768
    %v865 = vcvt.s32.f32 %v769
    %v866 = vcvt.s32.f32 %v770
    %v867 = vcvt.s32.f32 %v771
    %v868 = vcvt.s32.f32 %v772
    %v869 = vcvt.s32.f32 %v773
    %v870 = vcvt.s32.f32 %v774
    %v871 = vcvt.s32.f32 %v775
    %v872 = vcvt.s32.f32 %v776
    %873 = vmatprep.subr.mxu0 0.0
    %874 = vmatpush1.msra.mxu0 %v85
    %875 = vmatprep.subr.mxu0 0.0
    %876 = vmatpush1.msra.mxu0 %v86
    %877 = vmatprep.subr.mxu0 0.0
    %878 = vmatpush1.msra.mxu0 %v87
    %879 = vmatprep.subr.mxu0 0.0
    %880 = vmatpush1.msra.mxu0 %v88
    %881 = vmatprep.subr.mxu0 0.0
    %882 = vmatpush1.msra.mxu0 %v89
    %883 = vmatprep.subr.mxu0 0.0
    %884 = vmatpush1.msra.mxu0 %v90
    %885 = vmatprep.subr.mxu0 0.0
    %886 = vmatpush1.msra.mxu0 %v91
    %887 = vmatprep.subr.mxu0 0.0
    %888 = vmatpush1.msra.mxu0 %v92
    %889 = vmatprep.subr.mxu0 0.0
    %890 = vmatpush1.msra.mxu0 %v93
    %891 = vmatprep.subr.mxu0 0.0
    %892 = vmatpush1.msra.mxu0 %v94
    %893 = vmatprep.subr.mxu0 0.0
    %894 = vmatpush1.msra.mxu0 %v95
    %895 = vmatprep.subr.mxu0 0.0
    %896 = vmatpush1.msra.mxu0 %v96
    %897 = vmatprep.subr.mxu0 0.0
    %898 = vmatpush1.msra.mxu0 %v97
    %899 = vmatprep.subr.mxu0 0.0
    %900 = vmatpush1.msra.mxu0 %v98
    %901 = vmatprep.subr.mxu0 0.0
    %902 = vmatpush1.msra.mxu0 %v99
    %903 = vmatprep.subr.mxu0 0.0
    %904 = vmatpush1.msra.mxu0 %v100
    %905 = vmatprep.subr.mxu0 0.0
    %906 = vmatpush1.msra.mxu0 %v101
    %907 = vmatprep.subr.mxu0 0.0
    %908 = vmatpush1.msra.mxu0 %v102
    %909 = vmatprep.subr.mxu0 0.0
    %910 = vmatpush1.msra.mxu0 %v103
    %911 = vmatprep.subr.mxu0 0.0
    %912 = vmatpush1.msra.mxu0 %v104
    %913 = vmatprep.subr.mxu0 0.0
    %914 = vmatpush1.msra.mxu0 %v105
    %915 = vmatprep.subr.mxu0 0.0
    %916 = vmatpush1.msra.mxu0 %v106
    %917 = vmatprep.subr.mxu0 0.0
    %918 = vmatpush1.msra.mxu0 %v107
    %919 = vmatprep.subr.mxu0 0.0
    %920 = vmatpush1.msra.mxu0 %v108
    %921 = vmatprep.subr.mxu0 0.0
    %922 = vmatpush1.msra.mxu0 %v109
    %923 = vmatprep.subr.mxu0 0.0
    %924 = vmatpush1.msra.mxu0 %v110
    %925 = vmatprep.subr.mxu0 0.0
    %926 = vmatpush1.msra.mxu0 %v111
    %927 = vmatprep.subr.mxu0 0.0
    %928 = vmatpush1.msra.mxu0 %v112
    %929 = vmatprep.subr.mxu0 0.0
    %930 = vmatpush1.msra.mxu0 %v113
    %931 = vmatprep.subr.mxu0 0.0
    %932 = vmatpush1.msra.mxu0 %v114
    %933 = vmatprep.subr.mxu0 0.0
    %934 = vmatpush1.msra.mxu0 %v115
    %935 = vmatprep.subr.mxu0 0.0
    %936 = vmatpush1.msra.mxu0 %v116
    %937 = vmatprep.mubr.f32.mxu0 %v778
    %938 = vmatmul.mubr.f32.gmra.mrb[0].mxu0 %v777
    %v939 = vpop.f32.mrb[0].mxu0
    %v940 = vadd.f32 0.0, %v939
    %v941 = vpop.f32.mrb[0].mxu0
    %942 = vmatprep.mubr.f32.mxu0 %v781
    %943 = vmatmul.mubr.f32.gmra.mrb[0].mxu0 %v780
    %v944 = vpop.f32.mrb[0].mxu0
    %v945 = vadd.f32 0.0, %v944
    %v946 = vpop.f32.mrb[0].mxu0
    %947 = vmatprep.mubr.f32.mxu0 %v784
    %948 = vmatmul.mubr.f32.gmra.mrb[0].mxu0 %v783
    %v949 = vpop.f32.mrb[0].mxu0
    %v950 = vadd.f32 0.0, %v949
    %v951 = vpop.f32.mrb[0].mxu0
    %952 = vmatprep.mubr.f32.mxu0 %v787
    %953 = vmatmul.mubr.f32.gmra.mrb[0].mxu0 %v786
    %v954 = vpop.f32.mrb[0].mxu0
    %v955 = vadd.f32 0.0, %v954
    %v956 = vpop.f32.mrb[0].mxu0
    %957 = vmatprep.mubr.f32.mxu0 %v790
    %958 = vmatmul.mubr.f32.gmra.mrb[0].mxu0 %v789
    %v959 = vpop.f32.mrb[0].mxu0
    %v960 = vadd.f32 0.0, %v959
    %v961 = vpop.f32.mrb[0].mxu0
    %962 = vmatprep.mubr.f32.mxu0 %v793
    %963 = vmatmul.mubr.f32.gmra.mrb[0].mxu0 %v792
    %v964 = vpop.f32.mrb[0].mxu0
    %v965 = vadd.f32 0.0, %v964
    %v966 = vpop.f32.mrb[0].mxu0
    %967 = vmatprep.mubr.f32.mxu0 %v796
    %968 = vmatmul.mubr.f32.gmra.mrb[0].mxu0 %v795
    %v969 = vpop.f32.mrb[0].mxu0
    %v970 = vadd.f32 0.0, %v969
    %v971 = vpop.f32.mrb[0].mxu0
    %972 = vmatprep.mubr.f32.mxu0 %v799
    %973 = vmatmul.mubr.f32.gmra.mrb[0].mxu0 %v798
    %v974 = vpop.f32.mrb[0].mxu0
    %v975 = vadd.f32 0.0, %v974
    %v976 = vpop.f32.mrb[0].mxu0
    %977 = vmatprep.mubr.f32.mxu0 %v802
    %978 = vmatmul.mubr.f32.gmra.mrb[0].mxu0 %v801
    %v979 = vpop.f32.mrb[0].mxu0
    %v980 = vadd.f32 0.0, %v979
    %v981 = vpop.f32.mrb[0].mxu0
    %982 = vmatprep.mubr.f32.mxu0 %v805
    %983 = vmatmul.mubr.f32.gmra.mrb[0].mxu0 %v804
    %v984 = vpop.f32.mrb[0].mxu0
    %v985 = vadd.f32 0.0, %v984
    %v986 = vpop.f32.mrb[0].mxu0
    %987 = vmatprep.mubr.f32.mxu0 %v808
    %988 = vmatmul.mubr.f32.gmra.mrb[0].mxu0 %v807
    %v989 = vpop.f32.mrb[0].mxu0
    %v990 = vadd.f32 0.0, %v989
    %v991 = vpop.f32.mrb[0].mxu0
    %992 = vmatprep.mubr.f32.mxu0 %v811
    %993 = vmatmul.mubr.f32.gmra.mrb[0].mxu0 %v810
    %v994 = vpop.f32.mrb[0].mxu0
    %v995 = vadd.f32 0.0, %v994
    %v996 = vpop.f32.mrb[0].mxu0
    %997 = vmatprep.mubr.f32.mxu0 %v814
    %998 = vmatmul.mubr.f32.gmra.mrb[0].mxu0 %v813
    %v999 = vpop.f32.mrb[0].mxu0
    %v1000 = vadd.f32 0.0, %v999
    %v1001 = vpop.f32.mrb[0].mxu0
    %1002 = vmatprep.mubr.f32.mxu0 %v817
    %1003 = vmatmul.mubr.f32.gmra.mrb[0].mxu0 %v816
    %v1004 = vpop.f32.mrb[0].mxu0
    %v1005 = vadd.f32 0.0, %v1004
    %v1006 = vpop.f32.mrb[0].mxu0
    %1007 = vmatprep.mubr.f32.mxu0 %v820
    %1008 = vmatmul.mubr.f32.gmra.mrb[0].mxu0 %v819
    %v1009 = vpop.f32.mrb[0].mxu0
    %v1010 = vadd.f32 0.0, %v1009
    %v1011 = vpop.f32.mrb[0].mxu0
    %1012 = vmatprep.mubr.f32.mxu0 %v823
    %1013 = vmatmul.mubr.f32.gmra.mrb[0].mxu0 %v822
    %v1014 = vpop.f32.mrb[0].mxu0
    %v1015 = vadd.f32 0.0, %v1014
    %v1016 = vpop.f32.mrb[0].mxu0
    %1017 = vmatprep.mubr.f32.mxu0 %v826
    %1018 = vmatmul.mubr.f32.gmra.mrb[0].mxu0 %v825
    %v1019 = vpop.f32.mrb[0].mxu0
    %v1020 = vadd.f32 0.0, %v1019
    %v1021 = vpop.f32.mrb[0].mxu0
    %1022 = vmatprep.mubr.f32.mxu0 %v829
    %1023 = vmatmul.mubr.f32.gmra.mrb[0].mxu0 %v828
    %v1024 = vpop.f32.mrb[0].mxu0
    %v1025 = vadd.f32 0.0, %v1024
    %v1026 = vpop.f32.mrb[0].mxu0
    %1027 = vmatprep.mubr.f32.mxu0 %v832
    %1028 = vmatmul.mubr.f32.gmra.mrb[0].mxu0 %v831
    %v1029 = vpop.f32.mrb[0].mxu0
    %v1030 = vadd.f32 0.0, %v1029
    %v1031 = vpop.f32.mrb[0].mxu0
    %1032 = vmatprep.mubr.f32.mxu0 %v835
    %1033 = vmatmul.mubr.f32.gmra.mrb[0].mxu0 %v834
    %v1034 = vpop.f32.mrb[0].mxu0
    %v1035 = vadd.f32 0.0, %v1034
    %v1036 = vpop.f32.mrb[0].mxu0
    %1037 = vmatprep.mubr.f32.mxu0 %v838
    %1038 = vmatmul.mubr.f32.gmra.mrb[0].mxu0 %v837
    %v1039 = vpop.f32.mrb[0].mxu0
    %v1040 = vadd.f32 0.0, %v1039
    %v1041 = vpop.f32.mrb[0].mxu0
    %1042 = vmatprep.mubr.f32.mxu0 %v841
    %1043 = vmatmul.mubr.f32.gmra.mrb[0].mxu0 %v840
    %v1044 = vpop.f32.mrb[0].mxu0
    %v1045 = vadd.f32 0.0, %v1044
    %v1046 = vpop.f32.mrb[0].mxu0
    %1047 = vmatprep.mubr.f32.mxu0 %v844
    %1048 = vmatmul.mubr.f32.gmra.mrb[0].mxu0 %v843
    %v1049 = vpop.f32.mrb[0].mxu0
    %v1050 = vadd.f32 0.0, %v1049
    %v1051 = vpop.f32.mrb[0].mxu0
    %1052 = vmatprep.mubr.f32.mxu0 %v847
    %1053 = vmatmul.mubr.f32.gmra.mrb[0].mxu0 %v846
    %v1054 = vpop.f32.mrb[0].mxu0
    %v1055 = vadd.f32 0.0, %v1054
    %v1056 = vpop.f32.mrb[0].mxu0
    %1057 = vmatprep.mubr.f32.mxu0 %v850
    %1058 = vmatmul.mubr.f32.gmra.mrb[0].mxu0 %v849
    %v1059 = vpop.f32.mrb[0].mxu0
    %v1060 = vadd.f32 0.0, %v1059
    %v1061 = vpop.f32.mrb[0].mxu0
    %1062 = vmatprep.mubr.f32.mxu0 %v853
    %1063 = vmatmul.mubr.f32.gmra.mrb[0].mxu0 %v852
    %v1064 = vpop.f32.mrb[0].mxu0
    %v1065 = vadd.f32 0.0, %v1064
    %v1066 = vpop.f32.mrb[0].mxu0
    %1067 = vmatprep.mubr.f32.mxu0 %v856
    %1068 = vmatmul.mubr.f32.gmra.mrb[0].mxu0 %v855
    %v1069 = vpop.f32.mrb[0].mxu0
    %v1070 = vadd.f32 0.0, %v1069
    %v1071 = vpop.f32.mrb[0].mxu0
    %1072 = vmatprep.mubr.f32.mxu0 %v859
    %1073 = vmatmul.mubr.f32.gmra.mrb[0].mxu0 %v858
    %v1074 = vpop.f32.mrb[0].mxu0
    %v1075 = vadd.f32 0.0, %v1074
    %v1076 = vpop.f32.mrb[0].mxu0
    %1077 = vmatprep.mubr.f32.mxu0 %v862
    %1078 = vmatmul.mubr.f32.gmra.mrb[0].mxu0 %v861
    %v1079 = vpop.f32.mrb[0].mxu0
    %v1080 = vadd.f32 0.0, %v1079
    %v1081 = vpop.f32.mrb[0].mxu0
    %1082 = vmatprep.mubr.f32.mxu0 %v865
    %1083 = vmatmul.mubr.f32.gmra.mrb[0].mxu0 %v864
    %v1084 = vpop.f32.mrb[0].mxu0
    %v1085 = vadd.f32 0.0, %v1084
    %v1086 = vpop.f32.mrb[0].mxu0
    %1087 = vmatprep.mubr.f32.mxu0 %v868
    %1088 = vmatmul.mubr.f32.gmra.mrb[0].mxu0 %v867
    %v1089 = vpop.f32.mrb[0].mxu0
    %v1090 = vadd.f32 0.0, %v1089
    %v1091 = vpop.f32.mrb[0].mxu0
    %1092 = vmatprep.mubr.f32.mxu0 %v871
    %1093 = vmatmul.mubr.f32.gmra.mrb[0].mxu0 %v870
    %v1094 = vpop.f32.mrb[0].mxu0
    %v1095 = vadd.f32 0.0, %v1094
    %v1096 = vpop.f32.mrb[0].mxu0
    %1097 = vdwg.mxu0
    %1098 = vmatprep.subr.mxu0 0.0
    %1099 = vmatpush1.msra.mxu0 %v117
    %1100 = vmatprep.subr.mxu0 0.0
    %1101 = vmatpush1.msra.mxu0 %v118
    %1102 = vmatprep.subr.mxu0 0.0
    %1103 = vmatpush1.msra.mxu0 %v119
    %1104 = vmatprep.subr.mxu0 0.0
    %1105 = vmatpush1.msra.mxu0 %v120
    %1106 = vmatprep.subr.mxu0 0.0
    %1107 = vmatpush1.msra.mxu0 %v121
    %1108 = vmatprep.subr.mxu0 0.0
    %1109 = vmatpush1.msra.mxu0 %v122
    %1110 = vmatprep.subr.mxu0 0.0
    %1111 = vmatpush1.msra.mxu0 %v123
    %1112 = vmatprep.subr.mxu0 0.0
    %1113 = vmatpush1.msra.mxu0 %v124
    %1114 = vmatprep.subr.mxu0 0.0
    %1115 = vmatpush1.msra.mxu0 %v125
    %1116 = vmatprep.subr.mxu0 0.0
    %1117 = vmatpush1.msra.mxu0 %v126
    %1118 = vmatprep.subr.mxu0 0.0
    %1119 = vmatpush1.msra.mxu0 %v127
    %1120 = vmatprep.subr.mxu0 0.0
    %1121 = vmatpush1.msra.mxu0 %v128
    %1122 = vmatprep.subr.mxu0 0.0
    %1123 = vmatpush1.msra.mxu0 %v129
    %1124 = vmatprep.subr.mxu0 0.0
    %1125 = vmatpush1.msra.mxu0 %v130
    %1126 = vmatprep.subr.mxu0 0.0
    %1127 = vmatpush1.msra.mxu0 %v131
    %1128 = vmatprep.subr.mxu0 0.0
    %1129 = vmatpush1.msra.mxu0 %v132
    %1130 = vmatprep.subr.mxu0 0.0
    %1131 = vmatpush1.msra.mxu0 0.0
    %1132 = vmatprep.subr.mxu0 0.0
    %1133 = vmatpush1.msra.mxu0 0.0
    %1134 = vmatprep.subr.mxu0 0.0
    %1135 = vmatpush1.msra.mxu0 0.0
    %1136 = vmatprep.subr.mxu0 0.0
    %1137 = vmatpush1.msra.mxu0 0.0
    %1138 = vmatprep.subr.mxu0 0.0
    %1139 = vmatpush1.msra.mxu0 0.0
    %1140 = vmatprep.subr.mxu0 0.0
    %1141 = vmatpush1.msra.mxu0 0.0
    %1142 = vmatprep.subr.mxu0 0.0
    %1143 = vmatpush1.msra.mxu0 0.0
    %1144 = vmatprep.subr.mxu0 0.0
    %1145 = vmatpush1.msra.mxu0 0.0
    %1146 = vmatprep.subr.mxu0 0.0
    %1147 = vmatpush1.msra.mxu0 0.0
    %1148 = vmatprep.subr.mxu0 0.0
    %1149 = vmatpush1.msra.mxu0 0.0
    %1150 = vmatprep.subr.mxu0 0.0
    %1151 = vmatpush1.msra.mxu0 0.0
    %1152 = vmatprep.subr.mxu0 0.0
    %1153 = vmatpush1.msra.mxu0 0.0
    %1154 = vmatprep.subr.mxu0 0.0
    %1155 = vmatpush1.msra.mxu0 0.0
    %1156 = vmatprep.subr.mxu0 0.0
    %1157 = vmatpush1.msra.mxu0 0.0
    %1158 = vmatprep.subr.mxu0 0.0
    %1159 = vmatpush1.msra.mxu0 0.0
    %1160 = vmatprep.subr.mxu0 0.0
    %1161 = vmatpush1.msra.mxu0 0.0
    %1162 = vmatprep.mubr.f32.mxu0 0.0
    %1163 = vmatmul.mubr.f32.gmra.mrb[0].mxu0 %v779
    %v1164 = vpop.f32.mrb[0].mxu0
    %v1165 = vadd.f32 %v940, %v1164
    %v1166 = vpop.f32.mrb[0].mxu0
    %1167 = vmatprep.mubr.f32.mxu0 0.0
    %1168 = vmatmul.mubr.f32.gmra.mrb[0].mxu0 %v782
    %v1169 = vpop.f32.mrb[0].mxu0
    %v1170 = vadd.f32 %v945, %v1169
    %v1171 = vpop.f32.mrb[0].mxu0
    %1172 = vmatprep.mubr.f32.mxu0 0.0
    %1173 = vmatmul.mubr.f32.gmra.mrb[0].mxu0 %v785
    %v1174 = vpop.f32.mrb[0].mxu0
    %v1175 = vadd.f32 %v950, %v1174
    %v1176 = vpop.f32.mrb[0].mxu0
    %1177 = vmatprep.mubr.f32.mxu0 0.0
    %1178 = vmatmul.mubr.f32.gmra.mrb[0].mxu0 %v788
    %v1179 = vpop.f32.mrb[0].mxu0
    %v1180 = vadd.f32 %v955, %v1179
    %v1181 = vpop.f32.mrb[0].mxu0
    %1182 = vmatprep.mubr.f32.mxu0 0.0
    %1183 = vmatmul.mubr.f32.gmra.mrb[0].mxu0 %v791
    %v1184 = vpop.f32.mrb[0].mxu0
    %v1185 = vadd.f32 %v960, %v1184
    %v1186 = vpop.f32.mrb[0].mxu0
    %1187 = vmatprep.mubr.f32.mxu0 0.0
    %1188 = vmatmul.mubr.f32.gmra.mrb[0].mxu0 %v794
    %v1189 = vpop.f32.mrb[0].mxu0
    %v1190 = vadd.f32 %v965, %v1189
    %v1191 = vpop.f32.mrb[0].mxu0
    %1192 = vmatprep.mubr.f32.mxu0 0.0
    %1193 = vmatmul.mubr.f32.gmra.mrb[0].mxu0 %v797
    %v1194 = vpop.f32.mrb[0].mxu0
    %v1195 = vadd.f32 %v970, %v1194
    %v1196 = vpop.f32.mrb[0].mxu0
    %1197 = vmatprep.mubr.f32.mxu0 0.0
    %1198 = vmatmul.mubr.f32.gmra.mrb[0].mxu0 %v800
    %v1199 = vpop.f32.mrb[0].mxu0
    %v1200 = vadd.f32 %v975, %v1199
    %v1201 = vpop.f32.mrb[0].mxu0
    %1202 = vmatprep.mubr.f32.mxu0 0.0
    %1203 = vmatmul.mubr.f32.gmra.mrb[0].mxu0 %v803
    %v1204 = vpop.f32.mrb[0].mxu0
    %v1205 = vadd.f32 %v980, %v1204
    %v1206 = vpop.f32.mrb[0].mxu0
    %1207 = vmatprep.mubr.f32.mxu0 0.0
    %1208 = vmatmul.mubr.f32.gmra.mrb[0].mxu0 %v806
    %v1209 = vpop.f32.mrb[0].mxu0
    %v1210 = vadd.f32 %v985, %v1209
    %v1211 = vpop.f32.mrb[0].mxu0
    %1212 = vmatprep.mubr.f32.mxu0 0.0
    %1213 = vmatmul.mubr.f32.gmra.mrb[0].mxu0 %v809
    %v1214 = vpop.f32.mrb[0].mxu0
    %v1215 = vadd.f32 %v990, %v1214
    %v1216 = vpop.f32.mrb[0].mxu0
    %1217 = vmatprep.mubr.f32.mxu0 0.0
    %1218 = vmatmul.mubr.f32.gmra.mrb[0].mxu0 %v812
    %v1219 = vpop.f32.mrb[0].mxu0
    %v1220 = vadd.f32 %v995, %v1219
    %v1221 = vpop.f32.mrb[0].mxu0
    %1222 = vmatprep.mubr.f32.mxu0 0.0
    %1223 = vmatmul.mubr.f32.gmra.mrb[0].mxu0 %v815
    %v1224 = vpop.f32.mrb[0].mxu0
    %v1225 = vadd.f32 %v1000, %v1224
    %v1226 = vpop.f32.mrb[0].mxu0
    %1227 = vmatprep.mubr.f32.mxu0 0.0
    %1228 = vmatmul.mubr.f32.gmra.mrb[0].mxu0 %v818
    %v1229 = vpop.f32.mrb[0].mxu0
    %v1230 = vadd.f32 %v1005, %v1229
    %v1231 = vpop.f32.mrb[0].mxu0
    %1232 = vmatprep.mubr.f32.mxu0 0.0
    %1233 = vmatmul.mubr.f32.gmra.mrb[0].mxu0 %v821
    %v1234 = vpop.f32.mrb[0].mxu0
    %v1235 = vadd.f32 %v1010, %v1234
    %v1236 = vpop.f32.mrb[0].mxu0
    %1237 = vmatprep.mubr.f32.mxu0 0.0
    %1238 = vmatmul.mubr.f32.gmra.mrb[0].mxu0 %v824
    %v1239 = vpop.f32.mrb[0].mxu0
    %v1240 = vadd.f32 %v1015, %v1239
    %v1241 = vpop.f32.mrb[0].mxu0
    %1242 = vmatprep.mubr.f32.mxu0 0.0
    %1243 = vmatmul.mubr.f32.gmra.mrb[0].mxu0 %v827
    %v1244 = vpop.f32.mrb[0].mxu0
    %v1245 = vadd.f32 %v1020, %v1244
    %v1246 = vpop.f32.mrb[0].mxu0
    %1247 = vmatprep.mubr.f32.mxu0 0.0
    %1248 = vmatmul.mubr.f32.gmra.mrb[0].mxu0 %v830
    %v1249 = vpop.f32.mrb[0].mxu0
    %v1250 = vadd.f32 %v1025, %v1249
    %v1251 = vpop.f32.mrb[0].mxu0
    %1252 = vmatprep.mubr.f32.mxu0 0.0
    %1253 = vmatmul.mubr.f32.gmra.mrb[0].mxu0 %v833
    %v1254 = vpop.f32.mrb[0].mxu0
    %v1255 = vadd.f32 %v1030, %v1254
    %v1256 = vpop.f32.mrb[0].mxu0
    %1257 = vmatprep.mubr.f32.mxu0 0.0
    %1258 = vmatmul.mubr.f32.gmra.mrb[0].mxu0 %v836
    %v1259 = vpop.f32.mrb[0].mxu0
    %v1260 = vadd.f32 %v1035, %v1259
    %v1261 = vpop.f32.mrb[0].mxu0
    %1262 = vmatprep.mubr.f32.mxu0 0.0
    %1263 = vmatmul.mubr.f32.gmra.mrb[0].mxu0 %v839
    %v1264 = vpop.f32.mrb[0].mxu0
    %v1265 = vadd.f32 %v1040, %v1264
    %v1266 = vpop.f32.mrb[0].mxu0
    %1267 = vmatprep.mubr.f32.mxu0 0.0
    %1268 = vmatmul.mubr.f32.gmra.mrb[0].mxu0 %v842
    %v1269 = vpop.f32.mrb[0].mxu0
    %v1270 = vadd.f32 %v1045, %v1269
    %v1271 = vpop.f32.mrb[0].mxu0
    %1272 = vmatprep.mubr.f32.mxu0 0.0
    %1273 = vmatmul.mubr.f32.gmra.mrb[0].mxu0 %v845
    %v1274 = vpop.f32.mrb[0].mxu0
    %v1275 = vadd.f32 %v1050, %v1274
    %v1276 = vpop.f32.mrb[0].mxu0
    %1277 = vmatprep.mubr.f32.mxu0 0.0
    %1278 = vmatmul.mubr.f32.gmra.mrb[0].mxu0 %v848
    %v1279 = vpop.f32.mrb[0].mxu0
    %v1280 = vadd.f32 %v1055, %v1279
    %v1281 = vpop.f32.mrb[0].mxu0
    %1282 = vmatprep.mubr.f32.mxu0 0.0
    %1283 = vmatmul.mubr.f32.gmra.mrb[0].mxu0 %v851
    %v1284 = vpop.f32.mrb[0].mxu0
    %v1285 = vadd.f32 %v1060, %v1284
    %v1286 = vpop.f32.mrb[0].mxu0
    %1287 = vmatprep.mubr.f32.mxu0 0.0
    %1288 = vmatmul.mubr.f32.gmra.mrb[0].mxu0 %v854
    %v1289 = vpop.f32.mrb[0].mxu0
    %v1290 = vadd.f32 %v1065, %v1289
    %v1291 = vpop.f32.mrb[0].mxu0
    %1292 = vmatprep.mubr.f32.mxu0 0.0
    %1293 = vmatmul.mubr.f32.gmra.mrb[0].mxu0 %v857
    %v1294 = vpop.f32.mrb[0].mxu0
    %v1295 = vadd.f32 %v1070, %v1294
    %v1296 = vpop.f32.mrb[0].mxu0
    %1297 = vmatprep.mubr.f32.mxu0 0.0
    %1298 = vmatmul.mubr.f32.gmra.mrb[0].mxu0 %v860
    %v1299 = vpop.f32.mrb[0].mxu0
    %v1300 = vadd.f32 %v1075, %v1299
    %v1301 = vpop.f32.mrb[0].mxu0
    %1302 = vmatprep.mubr.f32.mxu0 0.0
    %1303 = vmatmul.mubr.f32.gmra.mrb[0].mxu0 %v863
    %v1304 = vpop.f32.mrb[0].mxu0
    %v1305 = vadd.f32 %v1080, %v1304
    %v1306 = vpop.f32.mrb[0].mxu0
    %1307 = vmatprep.mubr.f32.mxu0 0.0
    %1308 = vmatmul.mubr.f32.gmra.mrb[0].mxu0 %v866
    %v1309 = vpop.f32.mrb[0].mxu0
    %v1310 = vadd.f32 %v1085, %v1309
    %v1311 = vpop.f32.mrb[0].mxu0
    %1312 = vmatprep.mubr.f32.mxu0 0.0
    %1313 = vmatmul.mubr.f32.gmra.mrb[0].mxu0 %v869
    %v1314 = vpop.f32.mrb[0].mxu0
    %v1315 = vadd.f32 %v1090, %v1314
    %v1316 = vpop.f32.mrb[0].mxu0
    %1317 = vmatprep.mubr.f32.mxu0 0.0
    %1318 = vmatmul.mubr.f32.gmra.mrb[0].mxu0 %v872
    %v1319 = vpop.f32.mrb[0].mxu0
    %v1320 = vadd.f32 %v1095, %v1319
    %v1321 = vpop.f32.mrb[0].mxu0
    %1322 = vdwg.mxu0
    %v1323 = vadd.f32 %v1165, %v83
    %v1324 = vadd.f32 %v1170, %v84
    %v1325 = vadd.f32 %v1175, %v83
    %v1326 = vadd.f32 %v1180, %v84
    %v1327 = vadd.f32 %v1185, %v83
    %v1328 = vadd.f32 %v1190, %v84
    %v1329 = vadd.f32 %v1195, %v83
    %v1330 = vadd.f32 %v1200, %v84
    %v1331 = vadd.f32 %v1205, %v83
    %v1332 = vadd.f32 %v1210, %v84
    %v1333 = vadd.f32 %v1215, %v83
    %v1334 = vadd.f32 %v1220, %v84
    %v1335 = vadd.f32 %v1225, %v83
    %v1336 = vadd.f32 %v1230, %v84
    %v1337 = vadd.f32 %v1235, %v83
    %v1338 = vadd.f32 %v1240, %v84
    %v1339 = vadd.f32 %v1245, %v83
    %v1340 = vadd.f32 %v1250, %v84
    %v1341 = vadd.f32 %v1255, %v83
    %v1342 = vadd.f32 %v1260, %v84
    %v1343 = vadd.f32 %v1265, %v83
    %v1344 = vadd.f32 %v1270, %v84
    %v1345 = vadd.f32 %v1275, %v83
    %v1346 = vadd.f32 %v1280, %v84
    %v1347 = vadd.f32 %v1285, %v83
    %v1348 = vadd.f32 %v1290, %v84
    %v1349 = vadd.f32 %v1295, %v83
    %v1350 = vadd.f32 %v1300, %v84
    %v1351 = vadd.f32 %v1305, %v83
    %v1352 = vadd.f32 %v1310, %v84
    %v1353 = vadd.f32 %v1315, %v83
    %v1354 = vadd.f32 %v1320, %v84
    %1387 = vrot.lane.b32.xlu0 %v1323, 4
    %v1388 = vpop.permute.xlu0 %1387
    %1389 = vrot.lane.b32.xlu0 %v1324, 4
    %v1390 = vpop.permute.xlu0 %1389
    %1391 = vrot.lane.b32.xlu0 %v1325, 4
    %v1392 = vpop.permute.xlu0 %1391
    %1393 = vrot.lane.b32.xlu0 %v1326, 4
    %v1394 = vpop.permute.xlu0 %1393
    %1395 = vrot.lane.b32.xlu0 %v1327, 4
    %v1396 = vpop.permute.xlu0 %1395
    %1397 = vrot.lane.b32.xlu0 %v1328, 4
    %v1398 = vpop.permute.xlu0 %1397
    %1399 = vrot.lane.b32.xlu0 %v1329, 4
    %v1400 = vpop.permute.xlu0 %1399
    %1401 = vrot.lane.b32.xlu0 %v1330, 4
    %v1402 = vpop.permute.xlu0 %1401
    %1403 = vrot.lane.b32.xlu0 %v1331, 4
    %v1404 = vpop.permute.xlu0 %1403
    %1405 = vrot.lane.b32.xlu0 %v1332, 4
    %v1406 = vpop.permute.xlu0 %1405
    %1407 = vrot.lane.b32.xlu0 %v1333, 4
    %v1408 = vpop.permute.xlu0 %1407
    %1409 = vrot.lane.b32.xlu0 %v1334, 4
    %v1410 = vpop.permute.xlu0 %1409
    %1411 = vrot.lane.b32.xlu0 %v1335, 4
    %v1412 = vpop.permute.xlu0 %1411
    %1413 = vrot.lane.b32.xlu0 %v1336, 4
    %v1414 = vpop.permute.xlu0 %1413
    %1415 = vrot.lane.b32.xlu0 %v1337, 4
    %v1416 = vpop.permute.xlu0 %1415
    %1417 = vrot.lane.b32.xlu0 %v1338, 4
    %v1418 = vpop.permute.xlu0 %1417
    %1419 = vrot.lane.b32.xlu0 %v1339, 4
    %v1420 = vpop.permute.xlu0 %1419
    %1421 = vrot.lane.b32.xlu0 %v1340, 4
    %v1422 = vpop.permute.xlu0 %1421
    %1423 = vrot.lane.b32.xlu0 %v1341, 4
    %v1424 = vpop.permute.xlu0 %1423
    %1425 = vrot.lane.b32.xlu0 %v1342, 4
    %v1426 = vpop.permute.xlu0 %1425
    %1427 = vrot.lane.b32.xlu0 %v1343, 4
    %v1428 = vpop.permute.xlu0 %1427
    %1429 = vrot.lane.b32.xlu0 %v1344, 4
    %v1430 = vpop.permute.xlu0 %1429
    %1431 = vrot.lane.b32.xlu0 %v1345, 4
    %v1432 = vpop.permute.xlu0 %1431
    %1433 = vrot.lane.b32.xlu0 %v1346, 4
    %v1434 = vpop.permute.xlu0 %1433
    %1435 = vrot.lane.b32.xlu0 %v1347, 4
    %v1436 = vpop.permute.xlu0 %1435
    %1437 = vrot.lane.b32.xlu0 %v1348, 4
    %v1438 = vpop.permute.xlu0 %1437
    %1439 = vrot.lane.b32.xlu0 %v1349, 4
    %v1440 = vpop.permute.xlu0 %1439
    %1441 = vrot.lane.b32.xlu0 %v1350, 4
    %v1442 = vpop.permute.xlu0 %1441
    %1443 = vrot.lane.b32.xlu0 %v1351, 4
    %v1444 = vpop.permute.xlu0 %1443
    %1445 = vrot.lane.b32.xlu0 %v1352, 4
    %v1446 = vpop.permute.xlu0 %1445
    %1447 = vrot.lane.b32.xlu0 %v1353, 4
    %v1448 = vpop.permute.xlu0 %1447
    %1449 = vrot.lane.b32.xlu0 %v1354, 4
    %v1450 = vpop.permute.xlu0 %1449
    %vm1483 = vcmask 293920
    %1484 = vst.msk [vmem:[#allocation2] sm:$0xff] %vm1483, %v1388
    %1485 = vst.msk [vmem:[#allocation2 + $0x8] sm:$0xff] %vm1483, %v1390
    %1486 = vst.msk [vmem:[#allocation2 + $0x10] sm:$0xff] %vm1483, %v1392
    %1487 = vst.msk [vmem:[#allocation2 + $0x18] sm:$0xff] %vm1483, %v1394
    %1488 = vst.msk [vmem:[#allocation2 + $0x20] sm:$0xff] %vm1483, %v1396
    %1489 = vst.msk [vmem:[#allocation2 + $0x28] sm:$0xff] %vm1483, %v1398
    %1490 = vst.msk [vmem:[#allocation2 + $0x30] sm:$0xff] %vm1483, %v1400
    %1491 = vst.msk [vmem:[#allocation2 + $0x38] sm:$0xff] %vm1483, %v1402
    %1492 = vst.msk [vmem:[#allocation2 + $0x40] sm:$0xff] %vm1483, %v1404
    %1493 = vst.msk [vmem:[#allocation2 + $0x48] sm:$0xff] %vm1483, %v1406
    %1494 = vst.msk [vmem:[#allocation2 + $0x50] sm:$0xff] %vm1483, %v1408
    %1495 = vst.msk [vmem:[#allocation2 + $0x58] sm:$0xff] %vm1483, %v1410
    %1496 = vst.msk [vmem:[#allocation2 + $0x60] sm:$0xff] %vm1483, %v1412
    %1497 = vst.msk [vmem:[#allocation2 + $0x68] sm:$0xff] %vm1483, %v1414
    %1498 = vst.msk [vmem:[#allocation2 + $0x70] sm:$0xff] %vm1483, %v1416
    %1499 = vst.msk [vmem:[#allocation2 + $0x78] sm:$0xff] %vm1483, %v1418
    %1500 = vst.msk [vmem:[#allocation2 + $0x80] sm:$0xff] %vm1483, %v1420
    %1501 = vst.msk [vmem:[#allocation2 + $0x88] sm:$0xff] %vm1483, %v1422
    %1502 = vst.msk [vmem:[#allocation2 + $0x90] sm:$0xff] %vm1483, %v1424
    %1503 = vst.msk [vmem:[#allocation2 + $0x98] sm:$0xff] %vm1483, %v1426
    %1504 = vst.msk [vmem:[#allocation2 + $0xa0] sm:$0xff] %vm1483, %v1428
    %1505 = vst.msk [vmem:[#allocation2 + $0xa8] sm:$0xff] %vm1483, %v1430
    %1506 = vst.msk [vmem:[#allocation2 + $0xb0] sm:$0xff] %vm1483, %v1432
    %1507 = vst.msk [vmem:[#allocation2 + $0xb8] sm:$0xff] %vm1483, %v1434
    %1508 = vst.msk [vmem:[#allocation2 + $0xc0] sm:$0xff] %vm1483, %v1436
    %1509 = vst.msk [vmem:[#allocation2 + $0xc8] sm:$0xff] %vm1483, %v1438
    %1510 = vst.msk [vmem:[#allocation2 + $0xd0] sm:$0xff] %vm1483, %v1440
    %1511 = vst.msk [vmem:[#allocation2 + $0xd8] sm:$0xff] %vm1483, %v1442
    %1512 = vst.msk [vmem:[#allocation2 + $0xe0] sm:$0xff] %vm1483, %v1444
    %1513 = vst.msk [vmem:[#allocation2 + $0xe8] sm:$0xff] %vm1483, %v1446
    %1514 = vst.msk [vmem:[#allocation2 + $0xf0] sm:$0xff] %vm1483, %v1448
    %1515 = vst.msk [vmem:[#allocation2 + $0xf8] sm:$0xff] %vm1483, %v1450
    // Predicated region
    $region18: #{spatio_temporal_embedding.1} parent=1 // pred_check
      _
    $region19: #{spatio_temporal_embedding.1} parent=1 // pred_check_branch
      %1517 = sbr.rel (0) target = $region21
    $region20: #{spatio_temporal_embedding.1} parent=1 // pred_region
      %s1519 = ssub.s32 4096, 4096
      %1520 = vsyncadd [#allocation3], %s1519
      %s1521 = sshll.u32 [#allocation2], 4
      %s1522 = int_to_ptr.vmem [resolvable:$true] %s1521
      %1527 = dma.vmem_to_hbm [thread:$0]  %s1522, 4096, %s4, [#allocation3], 128, 128, 8
    $region21: #{spatio_temporal_embedding.1} parent=1 // pred_fallthru
      _
    // Predicated region
    $region22: #{spatio_temporal_embedding.1} parent=1 // pred_check
      _
    $region23: #{spatio_temporal_embedding.1} parent=1 // pred_check_branch
      %1529 = sbr.rel (0) target = $region25
    $region24: #{spatio_temporal_embedding.1} parent=1 // pred_region
      %1530 = dma.done [#allocation3], 4096
    $region25: #{spatio_temporal_embedding.1} parent=1 // pred_fallthru
      _
    %1531 = vsyncpa [#allocation3], 1

</llo_original>
